<compile_context>
chip_gen: v6e
topology: v6e:2x2x1
jax: 0.10.0
libtpu: 0.0.40
codegen_flags: <defaults>
</compile_context>

<pallas_src>
import functools

import jax
import jax.numpy as jnp
from jax import lax
from jax.experimental import pallas as pl
from jax.experimental.pallas import tpu as pltpu


def _round_up(x, m):
    return ((x + m - 1) // m) * m


def _device_vmem_bytes():
    try:
        return int(pltpu.get_tpu_info().vmem_capacity_bytes)
    except Exception:
        return 64 << 20  # v7x per-TensorCore floor; safe on every generation


def _bspec(shape, index_map, buffers=None):
    """BlockSpec, optionally single/multi-buffered via pipeline_mode."""
    if buffers is None or not hasattr(pl, "Buffered"):
        return pl.BlockSpec(shape, index_map)
    try:
        return pl.BlockSpec(shape, index_map, pipeline_mode=pl.Buffered(buffers))
    except TypeError:  # older jax without pipeline_mode
        return pl.BlockSpec(shape, index_map)


# ---------------------------------------------------------------------------
# Shared epilogue for the single-pass (full column strip) kernels.
# ---------------------------------------------------------------------------
def _row_strip_epilogue(sim, keep, pos, loss_ref, npos_ref, temperature,
                        scale_by_temperature):
    """Softmax / log-prob epilogue on one (tile_b, Bp) similarity strip.

    keep: bool mask of columns entering the denominator.
    pos : bool positives mask.
    Never materializes log_probs or an f32 mask tensor.
    """
    row_max = jnp.max(sim, axis=1, keepdims=True)  # padding (0) never beats diag (1/T)
    logits = sim - row_max
    e = jnp.exp(logits)
    denom = jnp.sum(jnp.where(keep, e, 0.0), axis=1, keepdims=True)
    denom = jnp.maximum(denom, jnp.float32(1e-30))           # guard log(0)
    num_pos = jnp.sum(jnp.where(pos, 1.0, 0.0), axis=1)      # (tb,)
    pos_logit_sum = jnp.sum(jnp.where(pos, logits, 0.0), axis=1)
    row_sum = pos_logit_sum - num_pos * jnp.log(denom)[:, 0]
    loss_rows = -(row_sum / jnp.maximum(num_pos, jnp.float32(1.0)))
    if scale_by_temperature:
        loss_rows = loss_rows * jnp.float32(temperature)
    tb = loss_rows.shape[0]
    loss_ref[...] = loss_rows.reshape(1, tb)                  # lane-dense store
    npos_ref[...] = num_pos.reshape(1, tb)


# ---------------------------------------------------------------------------
# Single-pass kernels (full [Bp, Dp] operand resident in VMEM).
# ---------------------------------------------------------------------------
def _supcon_labels_kernel(row_lab_ref, col_lab_ref, fall_ref, loss_ref, npos_ref,
                          *, temperature, scale_by_temperature, n_valid):
    tile_b = row_lab_ref.shape[0]
    bp = fall_ref.shape[0]

    i = pl.program_id(0)
    row0 = pl.multiple_of(i * tile_b, tile_b)
    lhs = fall_ref[pl.ds(row0, tile_b), :]       # slice of the resident operand
    sim = lax.dot_general(lhs, fall_ref[...],
                          dimension_numbers=(((1,), (1,)), ((), ())),
                          preferred_element_type=jnp.float32)
    sim = sim * jnp.float32(1.0 / temperature)

    rows = row0 + lax.broadcasted_iota(jnp.int32, (tile_b, bp), 0)
    cols = lax.broadcasted_iota(jnp.int32, (tile_b, bp), 1)
    not_diag = rows != cols
    same = row_lab_ref[...] == col_lab_ref[...]  # (tb,1)==(1,bp) -> (tb,bp)

    if n_valid < bp:                             # static: only pay when padded
        keep = not_diag & (cols < n_valid)
    else:
        keep = not_diag                          # labels: weight == 1 - eye
    pos = same & keep

    _row_strip_epilogue(sim, keep, pos, loss_ref, npos_ref,
                        temperature, scale_by_temperature)


def _supcon_mask_kernel(fall_ref, mask_ref, loss_ref, npos_ref, *,
                        temperature, scale_by_temperature, n_valid):
    tile_b = mask_ref.shape[0]
    bp = fall_ref.shape[0]

    i = pl.program_id(0)
    row0 = pl.multiple_of(i * tile_b, tile_b)
    lhs = fall_ref[pl.ds(row0, tile_b), :]
    sim = lax.dot_general(lhs, fall_ref[...],
                          dimension_numbers=(((1,), (1,)), ((), ())),
                          preferred_element_type=jnp.float32)
    sim = sim * jnp.float32(1.0 / temperature)

    rows = row0 + lax.broadcasted_iota(jnp.int32, (tile_b, bp), 0)
    cols = lax.broadcasted_iota(jnp.int32, (tile_b, bp), 1)
    not_diag = rows != cols
    mask_b = mask_ref[...] > 0                   # int8 tile -> bool

    pos = mask_b & not_diag                      # mask * (1 - eye)
    keep = not_diag | jnp.logical_not(mask_b)    # weight = 1 - eye*mask
    if n_valid < bp:
        col_ok = cols < n_valid
        pos = pos & col_ok
        keep = keep & col_ok

    _row_strip_epilogue(sim, keep, pos, loss_ref, npos_ref,
                        temperature, scale_by_temperature)


# ---------------------------------------------------------------------------
# Column-tiled ("flash") labels kernel for large working sets.
# ---------------------------------------------------------------------------
def _supcon_labels_flash_kernel(row_lab_ref, col_lab_ref, frow_ref, fcol_ref,
                                loss_ref, npos_ref,
                                m_sc, den_sc, spos_sc, np_sc, *,
                                temperature, scale_by_temperature,
                                n_valid, n_total):
    tile_b = frow_ref.shape[0]
    tile_n = fcol_ref.shape[0]
    i = pl.program_id(0)
    k = pl.program_id(1)

    @pl.when(k == 0)
    def _():
        # global row max is always >= 0 (diagonal = 1/T, zero padding), so a 0 init
        # is exact and avoids -inf arithmetic.
        m_sc[...] = jnp.zeros_like(m_sc)
        den_sc[...] = jnp.zeros_like(den_sc)
        spos_sc[...] = jnp.zeros_like(spos_sc)
        np_sc[...] = jnp.zeros_like(np_sc)

    sim = lax.dot_general(frow_ref[...], fcol_ref[...],
                          dimension_numbers=(((1,), (1,)), ((), ())),
                          preferred_element_type=jnp.float32)
    sim = sim * jnp.float32(1.0 / temperature)

    rows = i * tile_b + lax.broadcasted_iota(jnp.int32, (tile_b, tile_n), 0)
    cols = k * tile_n + lax.broadcasted_iota(jnp.int32, (tile_b, tile_n), 1)
    not_diag = rows != cols
    same = row_lab_ref[...] == col_lab_ref[...]
    if n_valid < n_total:
        keep = not_diag & (cols < n_valid)
    else:
        keep = not_diag
    pos = same & keep

    m_prev = m_sc[...]
    m_new = jnp.maximum(m_prev, jnp.max(sim, axis=1, keepdims=True))
    alpha = jnp.exp(m_prev - m_new)
    e = jnp.exp(sim - m_new)
    den_sc[...] = den_sc[...] * alpha + jnp.sum(jnp.where(keep, e, 0.0),
                                                axis=1, keepdims=True)
    np_sc[...] = np_sc[...] + jnp.sum(jnp.where(pos, 1.0, 0.0),
                                      axis=1, keepdims=True)
    # Raw (unshifted) positive-sim sum; the max shift is applied analytically at the end.
    spos_sc[...] = spos_sc[...] + jnp.sum(jnp.where(pos, sim, 0.0),
                                          axis=1, keepdims=True)
    m_sc[...] = m_new

    @pl.when(k == pl.num_programs(1) - 1)
    def _():
        num_pos = np_sc[...][:, 0]
        denom = jnp.maximum(den_sc[...][:, 0], jnp.float32(1e-30))
        # sum((sim - m)*pos) - num_pos*log(denom) == spos - num_pos*(m + log(denom))
        row_sum = spos_sc[...][:, 0] - num_pos * (m_sc[...][:, 0] + jnp.log(denom))
        loss_rows = -(row_sum / jnp.maximum(num_pos, jnp.float32(1.0)))
        if scale_by_temperature:
            loss_rows = loss_rows * jnp.float32(temperature)
        loss_ref[...] = loss_rows.reshape(1, tile_b)
        npos_ref[...] = num_pos.reshape(1, tile_b)


# ---------------------------------------------------------------------------
# Wrapper
# ---------------------------------------------------------------------------
def supcon_loss(features, labels=None, mask=None, *, temperature=0.07,
                scale_by_temperature=True, matmul_in_bf16=True,
                column_tiled=None):
    """JAX/Pallas equivalent of SupConLoss.forward (features: [B, views, D])."""
    features = jnp.asarray(features, jnp.float32)
    if features.ndim != 3:
        raise ValueError('features must be [batch, views, hidden]')
    B = features.shape[0]

    # --- sum over views + L2 normalize (cheap; keeps the kernel at [B, D]) ---
    f = jnp.sum(features, axis=1)                                # (B, D)
    sq = jnp.sum(f * f, axis=-1, keepdims=True)
    f = f * lax.rsqrt(jnp.maximum(sq, 1e-24))   # == f / max(||f||_2, 1e-12)
    D = f.shape[1]

    # --- resolve labels / mask, mirroring the PyTorch branches ---
    if labels is not None and mask is not None:
        raise ValueError('Cannot define both `labels` and `mask`')
    labels_i = None
    mask_i8 = None
    if labels is None and mask is None:
        labels_i = jnp.arange(B, dtype=jnp.int32)                # identity mask
    elif labels is not None:
        lab = jnp.asarray(labels)
        if lab.shape[0] != B:
            raise ValueError('Num of labels does not match num of features')
        lab2 = lab.reshape(B, -1)
        if lab2.shape[1] == 1 and jnp.issubdtype(lab2.dtype, jnp.integer):
            labels_i = lab2[:, 0].astype(jnp.int32)              # in-kernel mask
        else:
            # Vector / non-integer labels: full-label equality (same semantics as
            # the PyTorch vocab remap), streamed as an int8 mask.
            mask_i8 = jnp.all(lab2[:, None, :] == lab2[None, :, :],
                              axis=-1).astype(jnp.int8)
    else:
        mask = jnp.asarray(mask)
        if mask.shape != (B, B):
            raise ValueError('mask must be [batch_size, batch_size]')
        mask_i8 = (mask > 0).astype(jnp.int8)

    # --- tiling (MXU / vreg aligned) ---
    tile_b = 256 if B >= 512 else 128           # keep >= 2 parallel row steps
    Bp = _round_up(B, tile_b)
    Dp = _round_up(D, 128)
    if matmul_in_bf16 and Dp % 256 == 128 and (_round_up(D, 256) - D) <= 64:
        Dp = _round_up(D, 256)                  # fill the 256-deep MXU when cheap

    op_dtype = jnp.bfloat16 if matmul_in_bf16 else jnp.float32
    f_op = f.astype(op_dtype)                   # cast once, in the wrapper
    if (Bp, Dp) != (B, D):
        f_op = jnp.pad(f_op, ((0, Bp - B), (0, Dp - D)))
    # TODO(synk): if lower_as_mlir shows a per-step RHS layout transpose for the
    #             ((1,),(1,)) contraction, pre-transpose f_op to (Dp, Bp) here.

    elem = 2 if matmul_in_bf16 else 4
    vmem_cap = _device_vmem_bytes()
    vmem_budget = vmem_cap - (8 << 20)
    single_pass_vmem = (Bp * Dp * elem               # resident embeddings (x1 buffer)
                        + 8 * tile_b * Bp * 4        # f32 strip intermediates
                        + Bp * 4 + 2 * tile_b * 4    # labels
                        + 2 * 2 * 2 * tile_b * 4)    # outputs (double-buffered)

    out_shape = (jax.ShapeDtypeStruct((1, Bp), jnp.float32),
                 jax.ShapeDtypeStruct((1, Bp), jnp.float32))

    if labels_i is not None:
        if Bp == B:
            lab_pad = labels_i
        else:
            # pad with -1 so padded entries never alias a real label
            lab_pad = jnp.pad(labels_i, (0, Bp - B), constant_values=-1)
        lab_row = lab_pad.reshape(Bp, 1)
        lab_col = lab_pad.reshape(1, Bp)

        use_flash = (single_pass_vmem > vmem_budget) if column_tiled is None \
            else bool(column_tiled)

        if not use_flash:
            kernel = functools.partial(
                _supcon_labels_kernel,
                temperature=float(temperature),
                scale_by_temperature=bool(scale_by_temperature),
                n_valid=B)
            grid = (Bp // tile_b,)
            vmem_limit = int(min(max(16 << 20, single_pass_vmem + (4 << 20)),
                                 vmem_cap - (4 << 20)))
            params = pltpu.CompilerParams(dimension_semantics=("parallel",),
                                          vmem_limit_bytes=vmem_limit)

            def call(buffers):
                return pl.pallas_call(
                    kernel, grid=grid,
                    in_specs=[
                        pl.BlockSpec((tile_b, 1), lambda i: (i, 0)),   # row labels
                        _bspec((1, Bp), lambda i: (0, 0), buffers),    # all labels
                        _bspec((Bp, Dp), lambda i: (0, 0), buffers),   # all embeddings
                    ],
                    out_specs=(pl.BlockSpec((1, tile_b), lambda i: (0, i)),
                               pl.BlockSpec((1, tile_b), lambda i: (0, i))),
                    out_shape=out_shape,
                    compiler_params=params,
                )(lab_row, lab_col, f_op)

            try:
                loss_rows, num_pos = call(1)       # single-buffer resident operands
            except Exception:
                loss_rows, num_pos = call(None)    # fall back to default buffering
        else:
            # Flash / column-tiled path: working set capped at (tile_b, tile_n).
            # TODO(synk): add D-axis tiling for extremely large hidden dims.
            tile_n = 512 if Bp % 512 == 0 else (256 if Bp % 256 == 0 else 128)
            grid = (Bp // tile_b, Bp // tile_n)
            flash_vmem = (2 * tile_b * Dp * elem + 2 * tile_n * Dp * elem
                          + 8 * tile_b * tile_n * 4
                          + 2 * tile_b * 4 + 2 * tile_n * 4
                          + 4 * tile_b * 4 + 2 * 2 * 2 * tile_b * 4)
            vmem_limit = int(min(max(16 << 20, flash_vmem + (4 << 20)),
                                 vmem_cap - (4 << 20)))
            params = pltpu.CompilerParams(
                dimension_semantics=("parallel", "arbitrary"),
                vmem_limit_bytes=vmem_limit)
            kernel = functools.partial(
                _supcon_labels_flash_kernel,
                temperature=float(temperature),
                scale_by_temperature=bool(scale_by_temperature),
                n_valid=B, n_total=Bp)
            loss_rows, num_pos = pl.pallas_call(
                kernel, grid=grid,
                in_specs=[
                    pl.BlockSpec((tile_b, 1), lambda i, k: (i, 0)),   # row labels
                    pl.BlockSpec((1, tile_n), lambda i, k: (0, k)),   # col labels
                    pl.BlockSpec((tile_b, Dp), lambda i, k: (i, 0)),  # row embeddings
                    pl.BlockSpec((tile_n, Dp), lambda i, k: (k, 0)),  # col embeddings
                ],
                out_specs=(pl.BlockSpec((1, tile_b), lambda i, k: (0, i)),
                           pl.BlockSpec((1, tile_b), lambda i, k: (0, i))),
                out_shape=out_shape,
                scratch_shapes=[pltpu.VMEM((tile_b, 1), jnp.float32)] * 4,
                compiler_params=params,
            )(lab_row, lab_col, f_op, f_op)
    else:
        # Explicit-mask fallback (still row-tiled, int8 mask streamed per tile).
        mask_pad = mask_i8 if Bp == B else jnp.pad(mask_i8,
                                                   ((0, Bp - B), (0, Bp - B)))
        kernel = functools.partial(
            _supcon_mask_kernel,
            temperature=float(temperature),
            scale_by_temperature=bool(scale_by_temperature),
            n_valid=B)
        grid = (Bp // tile_b,)
        mask_vmem = single_pass_vmem + 2 * tile_b * Bp          # + int8 mask tiles
        vmem_limit = int(min(max(16 << 20, mask_vmem + (4 << 20)),
                             vmem_cap - (4 << 20)))
        params = pltpu.CompilerParams(dimension_semantics=("parallel",),
                                      vmem_limit_bytes=vmem_limit)

        def call(buffers):
            return pl.pallas_call(
                kernel, grid=grid,
                in_specs=[
                    _bspec((Bp, Dp), lambda i: (0, 0), buffers),      # all embeddings
                    pl.BlockSpec((tile_b, Bp), lambda i: (i, 0)),     # int8 mask tile
                ],
                out_specs=(pl.BlockSpec((1, tile_b), lambda i: (0, i)),
                           pl.BlockSpec((1, tile_b), lambda i: (0, i))),
                out_shape=out_shape,
                compiler_params=params,
            )(f_op, mask_pad)

        try:
            loss_rows, num_pos = call(1)
        except Exception:
            loss_rows, num_pos = call(None)

    # --- final masked mean over rows with >0 positives (tiny wrapper reduction) ---
    loss_rows = loss_rows[0, :B]
    num_pos = num_pos[0, :B]
    valid = num_pos > 0.0
    count = jnp.sum(valid.astype(jnp.float32))
    total = jnp.sum(jnp.where(valid, loss_rows, 0.0))
    return jnp.where(count > 0.0, total / jnp.maximum(count, 1.0), 0.0)


# ---------------------------------------------------------------------------
# Pure-JAX reference matching the PyTorch module.
# ---------------------------------------------------------------------------
def _supcon_reference(features, labels, temperature, scale_by_temperature):
    f = jnp.sum(features, axis=1)
    f = f / jnp.maximum(jnp.linalg.norm(f, axis=1, keepdims=True), 1e-12)
    B = f.shape[0]
    sim = (f @ f.T) / temperature
    logits = sim - jnp.max(sim, axis=1, keepdims=True)
    exp_logits = jnp.exp(logits)
    lab = labels.reshape(-1, 1)
    m = (lab == lab.T).astype(jnp.float32)
    eye = jnp.eye(B, dtype=jnp.float32)
    pos = m * (1.0 - eye)
    neg = 1.0 - m
    denom = (jnp.sum(exp_logits * neg, axis=1, keepdims=True)
             + jnp.sum(exp_logits * pos, axis=1, keepdims=True))
    log_probs = logits - jnp.log(denom)
    num_pos = jnp.sum(pos, axis=1)
    row = jnp.sum(log_probs * pos, axis=1)
    valid = num_pos > 0
    per_row = jnp.where(valid, row / jnp.where(valid, num_pos, 1.0), 0.0)
    loss = -per_row
    if scale_by_temperature:
        loss = loss * temperature
    return jnp.sum(jnp.where(valid, loss, 0.0)) / jnp.sum(valid.astype(jnp.float32))


if __name__ == "__main__":
    key = jax.random.PRNGKey(0)
    k1, k2, k3 = jax.random.split(key, 3)

    # --- small case: labels path in f32 and bf16, plus the explicit-mask path ---
    B, L, D = 8, 8, 32
    features = jax.random.normal(k1, (B, L, D), dtype=jnp.float32)
    # Repeated classes plus one singleton class (3) to exercise the
    # num_positives_per_row > 0 filtering.
    labels = jnp.array([0, 1, 0, 2, 1, 0, 2, 3], dtype=jnp.int32)
    ref = _supcon_reference(features, labels, 0.07, True)

    loss_f32 = jax.block_until_ready(
        supcon_loss(features, labels=labels, matmul_in_bf16=False))
    assert jnp.isfinite(loss_f32), f"loss not finite: {loss_f32}"
    assert jnp.allclose(loss_f32, ref, rtol=1e-4, atol=1e-4), \
        (float(loss_f32), float(ref))

    loss_bf16 = jax.block_until_ready(supcon_loss(features, labels=labels))
    assert jnp.isfinite(loss_bf16), f"loss not finite: {loss_bf16}"
    assert jnp.allclose(loss_bf16, ref, rtol=3e-2, atol=3e-2), \
        (float(loss_bf16), float(ref))

    mask = (labels[:, None] == labels[None, :]).astype(jnp.float32)
    loss_mask = jax.block_until_ready(
        supcon_loss(features, mask=mask, matmul_in_bf16=False))
    assert jnp.allclose(loss_mask, ref, rtol=1e-4, atol=1e-4), \
        (float(loss_mask), float(ref))

    # --- larger, non-aligned case exercising the column-tiled (flash) path ---
    B2, L2, D2 = 300, 2, 64
    features2 = jax.random.normal(k2, (B2, L2, D2), dtype=jnp.float32)
    labels2 = jax.random.randint(k3, (B2,), 0, 7, dtype=jnp.int32)
    ref2 = _supcon_reference(features2, labels2, 0.07, True)

    loss_flash = jax.block_until_ready(
        supcon_loss(features2, labels=labels2, column_tiled=True))
    assert jnp.isfinite(loss_flash), f"loss not finite: {loss_flash}"
    assert jnp.allclose(loss_flash, ref2, rtol=3e-2, atol=3e-2), \
        (float(loss_flash), float(ref2))

    loss_auto = jax.block_until_ready(supcon_loss(features2, labels=labels2))
    assert jnp.allclose(loss_auto, loss_flash, rtol=1e-3, atol=1e-3), \
        (float(loss_auto), float(loss_flash))

    print("KERNEL_OK")
</pallas_src>

<mosaic_0001>
module attributes {stable_mosaic.version = 11 : i64} {
  func.func @_supcon_labels_kernel(%arg0: i32, %arg1: memref<128x1xi32, #tpu.memory_space<vmem>>, %arg2: memref<1x128xi32, #tpu.memory_space<vmem>>, %arg3: memref<128x128xf32, #tpu.memory_space<vmem>>, %arg4: memref<1x128xf32, #tpu.memory_space<vmem>>, %arg5: memref<1x128xf32, #tpu.memory_space<vmem>>) attributes {dimension_semantics = [#tpu.dimension_semantics<parallel>], iteration_bounds = array<i64: 1>, scalar_prefetch = 0 : i64, scratch_operands = 0 : i64, tpu.core_type = #tpu.core_type<tc>, window_params = [{transform_indices = @transform_0, window_bounds = array<i64: 128, 1>}, {pipeline_mode = #tpu.pipeline_mode<synchronous>, transform_indices = @transform_1, window_bounds = array<i64: 1, 128>}, {pipeline_mode = #tpu.pipeline_mode<synchronous>, transform_indices = @transform_2, window_bounds = array<i64: 128, 128>}, {transform_indices = @transform_3, window_bounds = array<i64: 1, 128>}, {transform_indices = @transform_4, window_bounds = array<i64: 1, 128>}]} {
    %c128_i32 = arith.constant 128 : i32
    %0 = arith.muli %arg0, %c128_i32 : i32
    %1 = tpu.assume_multiple %0, 128 : i32
    %2 = arith.index_cast %1 : i32 to index
    %c0 = arith.constant 0 : index
    %3 = vector.load %arg3[%2, %c0] : memref<128x128xf32, #tpu.memory_space<vmem>>, vector<128x128xf32>
    %c0_0 = arith.constant 0 : index
    %c0_1 = arith.constant 0 : index
    %4 = vector.load %arg3[%c0_0, %c0_1] : memref<128x128xf32, #tpu.memory_space<vmem>>, vector<128x128xf32>
    %cst = arith.constant dense<0.000000e+00> : vector<128x128xf32>
    %5 = tpu.matmul %3, %4, %cst {dimension_numbers = #tpu.dot_dimension_numbers<[1], [1], [0], [0], [0, 0, 1, 0], [], []>} : vector<128x128xf32>, vector<128x128xf32>, vector<128x128xf32> -> vector<128x128xf32>
    %cst_2 = arith.constant 14.2857141 : f32
    %6 = vector.broadcast %cst_2 : f32 to vector<128x128xf32>
    %7 = arith.mulf %5, %6 : vector<128x128xf32>
    %8 = tpu.iota {dimensions = array<i32: 0>} : vector<128x128xi32>
    %9 = vector.broadcast %1 : i32 to vector<128x128xi32>
    %10 = arith.addi %9, %8 : vector<128x128xi32>
    %11 = tpu.iota {dimensions = array<i32: 1>} : vector<128x128xi32>
    %12 = arith.cmpi ne, %10, %11 : vector<128x128xi32>
    %c0_3 = arith.constant 0 : index
    %c0_4 = arith.constant 0 : index
    %13 = vector.load %arg1[%c0_3, %c0_4] : memref<128x1xi32, #tpu.memory_space<vmem>>, vector<128x1xi32>
    %c0_5 = arith.constant 0 : index
    %c0_6 = arith.constant 0 : index
    %14 = vector.load %arg2[%c0_5, %c0_6] : memref<1x128xi32, #tpu.memory_space<vmem>>, vector<1x128xi32>
    %15 = vector.broadcast %13 : vector<128x1xi32> to vector<128x128xi32>
    %16 = vector.broadcast %14 : vector<1x128xi32> to vector<128x128xi32>
    %17 = arith.cmpi eq, %15, %16 : vector<128x128xi32>
    %c8_i32 = arith.constant 8 : i32
    %18 = vector.broadcast %c8_i32 : i32 to vector<128x128xi32>
    %19 = arith.cmpi slt, %11, %18 : vector<128x128xi32>
    %20 = arith.andi %12, %19 : vector<128x128xi1>
    %21 = arith.andi %17, %20 : vector<128x128xi1>
    %cst_7 = arith.constant dense<0xFF800000> : vector<128xf32>
    %22 = vector.multi_reduction <maximumf>, %7, %cst_7 [1] : vector<128x128xf32> to vector<128xf32>
    %23 = vector.shape_cast %22 : vector<128xf32> to vector<128x1xf32>
    %24 = vector.broadcast %23 : vector<128x1xf32> to vector<128x128xf32>
    %25 = arith.subf %7, %24 : vector<128x128xf32>
    %26 = math.exp %25 : vector<128x128xf32>
    %cst_8 = arith.constant 0.000000e+00 : f32
    %27 = vector.broadcast %cst_8 : f32 to vector<128x128xf32>
    %28 = arith.select %20, %26, %27 : vector<128x128xi1>, vector<128x128xf32>
    %cst_9 = arith.constant dense<0.000000e+00> : vector<128xf32>
    %29 = vector.multi_reduction <add>, %28, %cst_9 [1] : vector<128x128xf32> to vector<128xf32>
    %30 = vector.shape_cast %29 : vector<128xf32> to vector<128x1xf32>
    %cst_10 = arith.constant 1.000000e-30 : f32
    %31 = vector.broadcast %cst_10 : f32 to vector<128x1xf32>
    %32 = arith.maximumf %30, %31 : vector<128x1xf32>
    %cst_11 = arith.constant 1.000000e+00 : f32
    %cst_12 = arith.constant 0.000000e+00 : f32
    %33 = vector.broadcast %cst_11 : f32 to vector<128x128xf32>
    %34 = vector.broadcast %cst_12 : f32 to vector<128x128xf32>
    %35 = arith.select %21, %33, %34 : vector<128x128xi1>, vector<128x128xf32>
    %cst_13 = arith.constant dense<0.000000e+00> : vector<128xf32>
    %36 = vector.multi_reduction <add>, %35, %cst_13 [1] : vector<128x128xf32> to vector<128xf32>
    %cst_14 = arith.constant 0.000000e+00 : f32
    %37 = vector.broadcast %cst_14 : f32 to vector<128x128xf32>
    %38 = arith.select %21, %25, %37 : vector<128x128xi1>, vector<128x128xf32>
    %cst_15 = arith.constant dense<0.000000e+00> : vector<128xf32>
    %39 = vector.multi_reduction <add>, %38, %cst_15 [1] : vector<128x128xf32> to vector<128xf32>
    %40 = math.log %32 : vector<128x1xf32>
    %41 = vector.shape_cast %40 : vector<128x1xf32> to vector<128xf32>
    %42 = arith.mulf %36, %41 : vector<128xf32>
    %43 = arith.subf %39, %42 : vector<128xf32>
    %cst_16 = arith.constant 1.000000e+00 : f32
    %44 = vector.broadcast %cst_16 : f32 to vector<128xf32>
    %45 = arith.maximumf %36, %44 : vector<128xf32>
    %46 = arith.divf %43, %45 : vector<128xf32>
    %cst_17 = arith.constant 0.000000e+00 : f32
    %47 = vector.broadcast %cst_17 : f32 to vector<128xf32>
    %48 = arith.subf %47, %46 : vector<128xf32>
    %cst_18 = arith.constant 7.000000e-02 : f32
    %49 = vector.broadcast %cst_18 : f32 to vector<128xf32>
    %50 = arith.mulf %48, %49 : vector<128xf32>
    %51 = vector.shape_cast %50 : vector<128xf32> to vector<1x128xf32>
    %c0_19 = arith.constant 0 : index
    %c0_20 = arith.constant 0 : index
    %52 = vector.load %arg4[%c0_19, %c0_20] : memref<1x128xf32, #tpu.memory_space<vmem>>, vector<1x128xf32>
    tpu.vector_store %arg4[%c0_19, %c0_20], %51 {strides = array<i32>} : memref<1x128xf32, #tpu.memory_space<vmem>>, vector<1x128xf32>,
    %53 = vector.shape_cast %36 : vector<128xf32> to vector<1x128xf32>
    %c0_21 = arith.constant 0 : index
    %c0_22 = arith.constant 0 : index
    %54 = vector.load %arg5[%c0_21, %c0_22] : memref<1x128xf32, #tpu.memory_space<vmem>>, vector<1x128xf32>
    tpu.vector_store %arg5[%c0_21, %c0_22], %53 {strides = array<i32>} : memref<1x128xf32, #tpu.memory_space<vmem>>, vector<1x128xf32>,
    return
  }
  func.func @transform_0(%arg0: i32) -> (i32, i32) {
    %c0_i32 = arith.constant 0 : i32
    %c0_i32_0 = arith.constant 0 : i32
    return %arg0, %c0_i32 : i32, i32
  }
  func.func @transform_1(%arg0: i32) -> (i32, i32) {
    %c0_i32 = arith.constant 0 : i32
    %c0_i32_0 = arith.constant 0 : i32
    %c0_i32_1 = arith.constant 0 : i32
    return %c0_i32, %c0_i32_0 : i32, i32
  }
  func.func @transform_2(%arg0: i32) -> (i32, i32) {
    %c0_i32 = arith.constant 0 : i32
    %c0_i32_0 = arith.constant 0 : i32
    %c0_i32_1 = arith.constant 0 : i32
    return %c0_i32, %c0_i32_0 : i32, i32
  }
  func.func @transform_3(%arg0: i32) -> (i32, i32) {
    %c0_i32 = arith.constant 0 : i32
    %c0_i32_0 = arith.constant 0 : i32
    return %c0_i32, %arg0 : i32, i32
  }
  func.func @transform_4(%arg0: i32) -> (i32, i32) {
    %c0_i32 = arith.constant 0 : i32
    %c0_i32_0 = arith.constant 0 : i32
    return %c0_i32, %arg0 : i32, i32
  }
}

module attributes {stable_mosaic.version = 11 : i64} {
  func.func @_supcon_labels_kernel(%arg0: i32, %arg1: memref<128x1xi32, #tpu.memory_space<vmem>>, %arg2: memref<1x128xi32, #tpu.memory_space<vmem>>, %arg3: memref<128x128xf32, #tpu.memory_space<vmem>>, %arg4: memref<1x128xf32, #tpu.memory_space<vmem>>, %arg5: memref<1x128xf32, #tpu.memory_space<vmem>>) attributes {dimension_semantics = [#tpu.dimension_semantics<parallel>], iteration_bounds = array<i64: 1>, scalar_prefetch = 0 : i64, scratch_operands = 0 : i64, tpu.core_type = #tpu.core_type<tc>, window_params = [{transform_indices = @transform_0, window_bounds = array<i64: 128, 1>}, {pipeline_mode = #tpu.pipeline_mode<synchronous>, transform_indices = @transform_1, window_bounds = array<i64: 1, 128>}, {pipeline_mode = #tpu.pipeline_mode<synchronous>, transform_indices = @transform_2, window_bounds = array<i64: 128, 128>}, {transform_indices = @transform_3, window_bounds = array<i64: 1, 128>}, {transform_indices = @transform_4, window_bounds = array<i64: 1, 128>}]} {
    %c128_i32 = arith.constant 128 : i32
    %0 = arith.muli %arg0, %c128_i32 : i32
    %1 = tpu.assume_multiple %0, 128 : i32
    %2 = arith.index_cast %1 : i32 to index
    %c0 = arith.constant 0 : index
    %3 = vector.load %arg3[%2, %c0] : memref<128x128xf32, #tpu.memory_space<vmem>>, vector<128x128xf32>
    %c0_0 = arith.constant 0 : index
    %c0_1 = arith.constant 0 : index
    %4 = vector.load %arg3[%c0_0, %c0_1] : memref<128x128xf32, #tpu.memory_space<vmem>>, vector<128x128xf32>
    %cst = arith.constant dense<0.000000e+00> : vector<128x128xf32>
    %5 = tpu.matmul %3, %4, %cst {dimension_numbers = #tpu.dot_dimension_numbers<[1], [1], [0], [0], [0, 0, 1, 0], [], []>} : vector<128x128xf32>, vector<128x128xf32>, vector<128x128xf32> -> vector<128x128xf32>
    %cst_2 = arith.constant 14.2857141 : f32
    %6 = vector.broadcast %cst_2 : f32 to vector<128x128xf32>
    %7 = arith.mulf %5, %6 : vector<128x128xf32>
    %8 = tpu.iota {dimensions = array<i32: 0>} : vector<128x128xi32>
    %9 = vector.broadcast %1 : i32 to vector<128x128xi32>
    %10 = arith.addi %9, %8 : vector<128x128xi32>
    %11 = tpu.iota {dimensions = array<i32: 1>} : vector<128x128xi32>
    %12 = arith.cmpi ne, %10, %11 : vector<128x128xi32>
    %c0_3 = arith.constant 0 : index
    %c0_4 = arith.constant 0 : index
    %13 = vector.load %arg1[%c0_3, %c0_4] : memref<128x1xi32, #tpu.memory_space<vmem>>, vector<128x1xi32>
    %c0_5 = arith.constant 0 : index
    %c0_6 = arith.constant 0 : index
    %14 = vector.load %arg2[%c0_5, %c0_6] : memref<1x128xi32, #tpu.memory_space<vmem>>, vector<1x128xi32>
    %15 = vector.broadcast %13 : vector<128x1xi32> to vector<128x128xi32>
    %16 = vector.broadcast %14 : vector<1x128xi32> to vector<128x128xi32>
    %17 = arith.cmpi eq, %15, %16 : vector<128x128xi32>
    %c8_i32 = arith.constant 8 : i32
    %18 = vector.broadcast %c8_i32 : i32 to vector<128x128xi32>
    %19 = arith.cmpi slt, %11, %18 : vector<128x128xi32>
    %20 = arith.andi %12, %19 : vector<128x128xi1>
    %21 = arith.andi %17, %20 : vector<128x128xi1>
    %cst_7 = arith.constant dense<0xFF800000> : vector<128xf32>
    %22 = vector.multi_reduction <maximumf>, %7, %cst_7 [1] : vector<128x128xf32> to vector<128xf32>
    %23 = vector.shape_cast %22 : vector<128xf32> to vector<128x1xf32>
    %24 = vector.broadcast %23 : vector<128x1xf32> to vector<128x128xf32>
    %25 = arith.subf %7, %24 : vector<128x128xf32>
    %26 = math.exp %25 : vector<128x128xf32>
    %cst_8 = arith.constant 0.000000e+00 : f32
    %27 = vector.broadcast %cst_8 : f32 to vector<128x128xf32>
    %28 = arith.select %20, %26, %27 : vector<128x128xi1>, vector<128x128xf32>
    %cst_9 = arith.constant dense<0.000000e+00> : vector<128xf32>
    %29 = vector.multi_reduction <add>, %28, %cst_9 [1] : vector<128x128xf32> to vector<128xf32>
    %30 = vector.shape_cast %29 : vector<128xf32> to vector<128x1xf32>
    %cst_10 = arith.constant 1.000000e-30 : f32
    %31 = vector.broadcast %cst_10 : f32 to vector<128x1xf32>
    %32 = arith.maximumf %30, %31 : vector<128x1xf32>
    %cst_11 = arith.constant 1.000000e+00 : f32
    %cst_12 = arith.constant 0.000000e+00 : f32
    %33 = vector.broadcast %cst_11 : f32 to vector<128x128xf32>
    %34 = vector.broadcast %cst_12 : f32 to vector<128x128xf32>
    %35 = arith.select %21, %33, %34 : vector<128x128xi1>, vector<128x128xf32>
    %cst_13 = arith.constant dense<0.000000e+00> : vector<128xf32>
    %36 = vector.multi_reduction <add>, %35, %cst_13 [1] : vector<128x128xf32> to vector<128xf32>
    %cst_14 = arith.constant 0.000000e+00 : f32
    %37 = vector.broadcast %cst_14 : f32 to vector<128x128xf32>
    %38 = arith.select %21, %25, %37 : vector<128x128xi1>, vector<128x128xf32>
    %cst_15 = arith.constant dense<0.000000e+00> : vector<128xf32>
    %39 = vector.multi_reduction <add>, %38, %cst_15 [1] : vector<128x128xf32> to vector<128xf32>
    %40 = math.log %32 : vector<128x1xf32>
    %41 = vector.shape_cast %40 : vector<128x1xf32> to vector<128xf32>
    %42 = arith.mulf %36, %41 : vector<128xf32>
    %43 = arith.subf %39, %42 : vector<128xf32>
    %cst_16 = arith.constant 1.000000e+00 : f32
    %44 = vector.broadcast %cst_16 : f32 to vector<128xf32>
    %45 = arith.maximumf %36, %44 : vector<128xf32>
    %46 = arith.divf %43, %45 : vector<128xf32>
    %cst_17 = arith.constant 0.000000e+00 : f32
    %47 = vector.broadcast %cst_17 : f32 to vector<128xf32>
    %48 = arith.subf %47, %46 : vector<128xf32>
    %cst_18 = arith.constant 7.000000e-02 : f32
    %49 = vector.broadcast %cst_18 : f32 to vector<128xf32>
    %50 = arith.mulf %48, %49 : vector<128xf32>
    %51 = vector.shape_cast %50 : vector<128xf32> to vector<1x128xf32>
    %c0_19 = arith.constant 0 : index
    %c0_20 = arith.constant 0 : index
    %52 = vector.load %arg4[%c0_19, %c0_20] : memref<1x128xf32, #tpu.memory_space<vmem>>, vector<1x128xf32>
    tpu.vector_store %arg4[%c0_19, %c0_20], %51 {strides = array<i32>} : memref<1x128xf32, #tpu.memory_space<vmem>>, vector<1x128xf32>,
    %53 = vector.shape_cast %36 : vector<128xf32> to vector<1x128xf32>
    %c0_21 = arith.constant 0 : index
    %c0_22 = arith.constant 0 : index
    %54 = vector.load %arg5[%c0_21, %c0_22] : memref<1x128xf32, #tpu.memory_space<vmem>>, vector<1x128xf32>
    tpu.vector_store %arg5[%c0_21, %c0_22], %53 {strides = array<i32>} : memref<1x128xf32, #tpu.memory_space<vmem>>, vector<1x128xf32>,
    return
  }
  func.func @transform_0(%arg0: i32) -> (i32, i32) {
    %c0_i32 = arith.constant 0 : i32
    %c0_i32_0 = arith.constant 0 : i32
    return %arg0, %c0_i32 : i32, i32
  }
  func.func @transform_1(%arg0: i32) -> (i32, i32) {
    %c0_i32 = arith.constant 0 : i32
    %c0_i32_0 = arith.constant 0 : i32
    %c0_i32_1 = arith.constant 0 : i32
    return %c0_i32, %c0_i32_0 : i32, i32
  }
  func.func @transform_2(%arg0: i32) -> (i32, i32) {
    %c0_i32 = arith.constant 0 : i32
    %c0_i32_0 = arith.constant 0 : i32
    %c0_i32_1 = arith.constant 0 : i32
    return %c0_i32, %c0_i32_0 : i32, i32
  }
  func.func @transform_3(%arg0: i32) -> (i32, i32) {
    %c0_i32 = arith.constant 0 : i32
    %c0_i32_0 = arith.constant 0 : i32
    return %c0_i32, %arg0 : i32, i32
  }
  func.func @transform_4(%arg0: i32) -> (i32, i32) {
    %c0_i32 = arith.constant 0 : i32
    %c0_i32_0 = arith.constant 0 : i32
    return %c0_i32, %arg0 : i32, i32
  }
}

</mosaic_0001>

<llo_original>
// kernel: tpu_custom_call.1
$region0: #{tpu_custom_call.1}
  #allocation0 [shape = 'u32[]', space=smem, size = 0x4, offset = 0x4, fixed_abs, tag = 'smem constant byte address 0x4 - core index']
  #allocation1 [shape = 'u32[144,128]{1,0:T(1,128)}', space=vmem, size = 0x12000, scoped, tag = 'internal scratch']
  %s0 = inlined_call_operand.vmem [shape: s32[128,1], index: 0, kind: input, shape index: {}]
  %s1 = inlined_call_operand.vmem [shape: s32[1,128], index: 1, kind: input, shape index: {}]
  %s2 = inlined_call_operand.vmem [shape: f32[128,128], index: 2, kind: input, shape index: {}]
  %s3 = inlined_call_operand.hbm [shape: f32[1,128], index: 3, kind: output, shape index: {0}]
  %s4 = inlined_call_operand.hbm [shape: f32[1,128], index: 4, kind: output, shape index: {1}]
  %5 = xla_tuple %s3, %s4
  %s6 = sld [smem:[#allocation0]]
  $region30: #{tpu_custom_call.1} parent=0
    _
  %s8 = ssub.s32 1, %s6
  %s9 = scalar_select 0, %s8, %s6
  $region1: #{tpu_custom_call.1} parent=0
    #allocation2 [shape = 'u8[512]{0}', space=vmem, size = 0x400, scoped, tag = 'output window, operand 0, single buffered']
    #allocation3 [shape = 's32[1]{0}', space=sflag, size = 0x4, scoped, tag = 'scoped memory for tpu_custom_call.1']
    #allocation4 [shape = 'u8[512]{0}', space=vmem, size = 0x400, scoped, tag = 'output window, operand 1, single buffered']
    #allocation5 [shape = 's32[1]{0}', space=sflag, size = 0x4, scoped, tag = 'scoped memory for tpu_custom_call.1']
    %10 = vsyncpa [#allocation3], 0
    %11 = vsyncpa [#allocation5], 0
    // Predicated region
    $region2: #{tpu_custom_call.1} parent=1 // pred_check
      _
    $region3: #{tpu_custom_call.1} parent=1 // pred_check_branch
      %13 = sbr.rel (0) target = $region5
    $region4: #{tpu_custom_call.1} parent=1 // pred_region
      _
    $region5: #{tpu_custom_call.1} parent=1 // pred_fallthru
      _
    // Predicated region
    $region6: #{tpu_custom_call.1} parent=1 // pred_check
      _
    $region7: #{tpu_custom_call.1} parent=1 // pred_check_branch
      %15 = sbr.rel (0) target = $region9
    $region8: #{tpu_custom_call.1} parent=1 // pred_region
      _
    $region9: #{tpu_custom_call.1} parent=1 // pred_fallthru
      _
    // Predicated region
    $region10: #{tpu_custom_call.1} parent=1 // pred_check
      _
    $region11: #{tpu_custom_call.1} parent=1 // pred_check_branch
      %17 = sbr.rel (0) target = $region13
    $region12: #{tpu_custom_call.1} parent=1 // pred_region
      _
    $region13: #{tpu_custom_call.1} parent=1 // pred_fallthru
      _
    %s18 = smul.u32 0, 128
    %s19 = scalar_lea.vmem %s2, %s18
    %v20 = vld [vmem:[%s19] sm:$0xff]
    %v21 = vld [vmem:[%s19 + $0x8] sm:$0xff]
    %v22 = vld [vmem:[%s19 + $0x10] sm:$0xff]
    %v23 = vld [vmem:[%s19 + $0x18] sm:$0xff]
    %v24 = vld [vmem:[%s19 + $0x20] sm:$0xff]
    %v25 = vld [vmem:[%s19 + $0x28] sm:$0xff]
    %v26 = vld [vmem:[%s19 + $0x30] sm:$0xff]
    %v27 = vld [vmem:[%s19 + $0x38] sm:$0xff]
    %v28 = vld [vmem:[%s19 + $0x40] sm:$0xff]
    %v29 = vld [vmem:[%s19 + $0x48] sm:$0xff]
    %v30 = vld [vmem:[%s19 + $0x50] sm:$0xff]
    %v31 = vld [vmem:[%s19 + $0x58] sm:$0xff]
    %v32 = vld [vmem:[%s19 + $0x60] sm:$0xff]
    %v33 = vld [vmem:[%s19 + $0x68] sm:$0xff]
    %v34 = vld [vmem:[%s19 + $0x70] sm:$0xff]
    %v35 = vld [vmem:[%s19 + $0x78] sm:$0xff]
    %v36 = vld [vmem:[%s2] sm:$0xff]
    %v37 = vld [vmem:[%s2 + $0x8] sm:$0xff]
    %v38 = vld [vmem:[%s2 + $0x10] sm:$0xff]
    %v39 = vld [vmem:[%s2 + $0x18] sm:$0xff]
    %v40 = vld [vmem:[%s2 + $0x20] sm:$0xff]
    %v41 = vld [vmem:[%s2 + $0x28] sm:$0xff]
    %v42 = vld [vmem:[%s2 + $0x30] sm:$0xff]
    %v43 = vld [vmem:[%s2 + $0x38] sm:$0xff]
    %v44 = vld [vmem:[%s2 + $0x40] sm:$0xff]
    %v45 = vld [vmem:[%s2 + $0x48] sm:$0xff]
    %v46 = vld [vmem:[%s2 + $0x50] sm:$0xff]
    %v47 = vld [vmem:[%s2 + $0x58] sm:$0xff]
    %v48 = vld [vmem:[%s2 + $0x60] sm:$0xff]
    %v49 = vld [vmem:[%s2 + $0x68] sm:$0xff]
    %v50 = vld [vmem:[%s2 + $0x70] sm:$0xff]
    %v51 = vld [vmem:[%s2 + $0x78] sm:$0xff]
    %52 = vmatprep.subr.mxu0 0.0
    %53 = vmatpush1.xpose.msra.mxu0 %v51
    %54 = vmatprep.subr.mxu0 0.0
    %55 = vmatpush1.xpose.msra.mxu0 %v50
    %56 = vmatprep.subr.mxu0 0.0
    %57 = vmatpush1.xpose.msra.mxu0 %v49
    %58 = vmatprep.subr.mxu0 0.0
    %59 = vmatpush1.xpose.msra.mxu0 %v48
    %60 = vmatprep.subr.mxu0 0.0
    %61 = vmatpush1.xpose.msra.mxu0 %v47
    %62 = vmatprep.subr.mxu0 0.0
    %63 = vmatpush1.xpose.msra.mxu0 %v46
    %64 = vmatprep.subr.mxu0 0.0
    %65 = vmatpush1.xpose.msra.mxu0 %v45
    %66 = vmatprep.subr.mxu0 0.0
    %67 = vmatpush1.xpose.msra.mxu0 %v44
    %68 = vmatprep.subr.mxu0 0.0
    %69 = vmatpush1.xpose.msra.mxu0 %v43
    %70 = vmatprep.subr.mxu0 0.0
    %71 = vmatpush1.xpose.msra.mxu0 %v42
    %72 = vmatprep.subr.mxu0 0.0
    %73 = vmatpush1.xpose.msra.mxu0 %v41
    %74 = vmatprep.subr.mxu0 0.0
    %75 = vmatpush1.xpose.msra.mxu0 %v40
    %76 = vmatprep.subr.mxu0 0.0
    %77 = vmatpush1.xpose.msra.mxu0 %v39
    %78 = vmatprep.subr.mxu0 0.0
    %79 = vmatpush1.xpose.msra.mxu0 %v38
    %80 = vmatprep.subr.mxu0 0.0
    %81 = vmatpush1.xpose.msra.mxu0 %v37
    %82 = vmatprep.subr.mxu0 0.0
    %83 = vmatpush1.xpose.msra.mxu0 %v36
    %84 = vmatprep.subr.mxu0 0.0
    %85 = vmatpush2.xpose.msra.mxu0 0.0
    %86 = vmatprep.subr.mxu0 0.0
    %87 = vmatpush2.xpose.msra.mxu0 0.0
    %88 = vmatprep.subr.mxu0 0.0
    %89 = vmatpush2.xpose.msra.mxu0 0.0
    %90 = vmatprep.subr.mxu0 0.0
    %91 = vmatpush2.xpose.msra.mxu0 0.0
    %92 = vmatprep.subr.mxu0 0.0
    %93 = vmatpush2.xpose.msra.mxu0 0.0
    %94 = vmatprep.subr.mxu0 0.0
    %95 = vmatpush2.xpose.msra.mxu0 0.0
    %96 = vmatprep.subr.mxu0 0.0
    %97 = vmatpush2.xpose.msra.mxu0 0.0
    %98 = vmatprep.subr.mxu0 0.0
    %99 = vmatpush2.xpose.msra.mxu0 0.0
    %100 = vmatprep.subr.mxu0 0.0
    %101 = vmatpush2.xpose.msra.mxu0 0.0
    %102 = vmatprep.subr.mxu0 0.0
    %103 = vmatpush2.xpose.msra.mxu0 0.0
    %104 = vmatprep.subr.mxu0 0.0
    %105 = vmatpush2.xpose.msra.mxu0 0.0
    %106 = vmatprep.subr.mxu0 0.0
    %107 = vmatpush2.xpose.msra.mxu0 0.0
    %108 = vmatprep.subr.mxu0 0.0
    %109 = vmatpush2.xpose.msra.mxu0 0.0
    %110 = vmatprep.subr.mxu0 0.0
    %111 = vmatpush2.xpose.msra.mxu0 0.0
    %112 = vmatprep.subr.mxu0 0.0
    %113 = vmatpush2.xpose.msra.mxu0 0.0
    %114 = vmatprep.subr.mxu0 0.0
    %115 = vmatpush2.xpose.msra.mxu0 0.0
    %116 = vmatprep.mubr.f32.mxu0 0.0
    %117 = vmatmul.mubr.f32.gmra.mxu0 %v20
    %v118 = vpop.f32.mrf.mxu0
    %v119 = vadd.f32 0.0, %v118
    %v120 = vpop.f32.mrf.mxu0
    %121 = vmatprep.mubr.f32.mxu0 0.0
    %122 = vmatmul.mubr.f32.gmra.mxu0 %v21
    %v123 = vpop.f32.mrf.mxu0
    %v124 = vadd.f32 0.0, %v123
    %v125 = vpop.f32.mrf.mxu0
    %126 = vmatprep.mubr.f32.mxu0 0.0
    %127 = vmatmul.mubr.f32.gmra.mxu0 %v22
    %v128 = vpop.f32.mrf.mxu0
    %v129 = vadd.f32 0.0, %v128
    %v130 = vpop.f32.mrf.mxu0
    %131 = vmatprep.mubr.f32.mxu0 0.0
    %132 = vmatmul.mubr.f32.gmra.mxu0 %v23
    %v133 = vpop.f32.mrf.mxu0
    %v134 = vadd.f32 0.0, %v133
    %v135 = vpop.f32.mrf.mxu0
    %136 = vmatprep.mubr.f32.mxu0 0.0
    %137 = vmatmul.mubr.f32.gmra.mxu0 %v24
    %v138 = vpop.f32.mrf.mxu0
    %v139 = vadd.f32 0.0, %v138
    %v140 = vpop.f32.mrf.mxu0
    %141 = vmatprep.mubr.f32.mxu0 0.0
    %142 = vmatmul.mubr.f32.gmra.mxu0 %v25
    %v143 = vpop.f32.mrf.mxu0
    %v144 = vadd.f32 0.0, %v143
    %v145 = vpop.f32.mrf.mxu0
    %146 = vmatprep.mubr.f32.mxu0 0.0
    %147 = vmatmul.mubr.f32.gmra.mxu0 %v26
    %v148 = vpop.f32.mrf.mxu0
    %v149 = vadd.f32 0.0, %v148
    %v150 = vpop.f32.mrf.mxu0
    %151 = vmatprep.mubr.f32.mxu0 0.0
    %152 = vmatmul.mubr.f32.gmra.mxu0 %v27
    %v153 = vpop.f32.mrf.mxu0
    %v154 = vadd.f32 0.0, %v153
    %v155 = vpop.f32.mrf.mxu0
    %156 = vmatprep.mubr.f32.mxu0 0.0
    %157 = vmatmul.mubr.f32.gmra.mxu0 %v28
    %v158 = vpop.f32.mrf.mxu0
    %v159 = vadd.f32 0.0, %v158
    %v160 = vpop.f32.mrf.mxu0
    %161 = vmatprep.mubr.f32.mxu0 0.0
    %162 = vmatmul.mubr.f32.gmra.mxu0 %v29
    %v163 = vpop.f32.mrf.mxu0
    %v164 = vadd.f32 0.0, %v163
    %v165 = vpop.f32.mrf.mxu0
    %166 = vmatprep.mubr.f32.mxu0 0.0
    %167 = vmatmul.mubr.f32.gmra.mxu0 %v30
    %v168 = vpop.f32.mrf.mxu0
    %v169 = vadd.f32 0.0, %v168
    %v170 = vpop.f32.mrf.mxu0
    %171 = vmatprep.mubr.f32.mxu0 0.0
    %172 = vmatmul.mubr.f32.gmra.mxu0 %v31
    %v173 = vpop.f32.mrf.mxu0
    %v174 = vadd.f32 0.0, %v173
    %v175 = vpop.f32.mrf.mxu0
    %176 = vmatprep.mubr.f32.mxu0 0.0
    %177 = vmatmul.mubr.f32.gmra.mxu0 %v32
    %v178 = vpop.f32.mrf.mxu0
    %v179 = vadd.f32 0.0, %v178
    %v180 = vpop.f32.mrf.mxu0
    %181 = vmatprep.mubr.f32.mxu0 0.0
    %182 = vmatmul.mubr.f32.gmra.mxu0 %v33
    %v183 = vpop.f32.mrf.mxu0
    %v184 = vadd.f32 0.0, %v183
    %v185 = vpop.f32.mrf.mxu0
    %186 = vmatprep.mubr.f32.mxu0 0.0
    %187 = vmatmul.mubr.f32.gmra.mxu0 %v34
    %v188 = vpop.f32.mrf.mxu0
    %v189 = vadd.f32 0.0, %v188
    %v190 = vpop.f32.mrf.mxu0
    %191 = vmatprep.mubr.f32.mxu0 0.0
    %192 = vmatmul.mubr.f32.gmra.mxu0 %v35
    %v193 = vpop.f32.mrf.mxu0
    %v194 = vadd.f32 0.0, %v193
    %v195 = vpop.f32.mrf.mxu0
    %196 = vdwg.mxu0
    %v197 = vmul.f32 %v119, 14.285714
    %v198 = vmul.f32 %v124, 14.285714
    %v199 = vmul.f32 %v129, 14.285714
    %v200 = vmul.f32 %v134, 14.285714
    %v201 = vmul.f32 %v139, 14.285714
    %v202 = vmul.f32 %v144, 14.285714
    %v203 = vmul.f32 %v149, 14.285714
    %v204 = vmul.f32 %v154, 14.285714
    %v205 = vmul.f32 %v159, 14.285714
    %v206 = vmul.f32 %v164, 14.285714
    %v207 = vmul.f32 %v169, 14.285714
    %v208 = vmul.f32 %v174, 14.285714
    %v209 = vmul.f32 %v179, 14.285714
    %v210 = vmul.f32 %v184, 14.285714
    %v211 = vmul.f32 %v189, 14.285714
    %v212 = vmul.f32 %v194, 14.285714
    %v213 = vlaneseq
    %v214 = vshrl.u32 %v213, 7
    %v215 = vadd.s32 %v214, 8
    %v216 = vadd.s32 %v214, 16
    %v217 = vadd.s32 %v214, 24
    %v218 = vadd.s32 %v214, 32
    %v219 = vadd.s32 %v214, 40
    %v220 = vadd.s32 %v214, 48
    %v221 = vadd.s32 %v214, 56
    %v222 = vadd.s32 %v214, 64
    %v223 = vadd.s32 %v214, 72
    %v224 = vadd.s32 %v214, 80
    %v225 = vadd.s32 %v214, 88
    %v226 = vadd.s32 %v214, 96
    %v227 = vadd.s32 %v214, 104
    %v228 = vadd.s32 %v214, 112
    %v229 = vadd.s32 %v214, 120
    %v230 = vstv %s18
    %v231 = vadd.s32 %v230, %v214
    %v232 = vadd.s32 %v230, %v215
    %v233 = vadd.s32 %v230, %v216
    %v234 = vadd.s32 %v230, %v217
    %v235 = vadd.s32 %v230, %v218
    %v236 = vadd.s32 %v230, %v219
    %v237 = vadd.s32 %v230, %v220
    %v238 = vadd.s32 %v230, %v221
    %v239 = vadd.s32 %v230, %v222
    %v240 = vadd.s32 %v230, %v223
    %v241 = vadd.s32 %v230, %v224
    %v242 = vadd.s32 %v230, %v225
    %v243 = vadd.s32 %v230, %v226
    %v244 = vadd.s32 %v230, %v227
    %v245 = vadd.s32 %v230, %v228
    %v246 = vadd.s32 %v230, %v229
    %v247 = vlaneseq
    %v248 = vand.u32 %v247, 127
    %vm249 = vcmp.ne.s32.totalorder %v231, %v248
    %vm250 = vcmp.ne.s32.totalorder %v232, %v248
    %vm251 = vcmp.ne.s32.totalorder %v233, %v248
    %vm252 = vcmp.ne.s32.totalorder %v234, %v248
    %vm253 = vcmp.ne.s32.totalorder %v235, %v248
    %vm254 = vcmp.ne.s32.totalorder %v236, %v248
    %vm255 = vcmp.ne.s32.totalorder %v237, %v248
    %vm256 = vcmp.ne.s32.totalorder %v238, %v248
    %vm257 = vcmp.ne.s32.totalorder %v239, %v248
    %vm258 = vcmp.ne.s32.totalorder %v240, %v248
    %vm259 = vcmp.ne.s32.totalorder %v241, %v248
    %vm260 = vcmp.ne.s32.totalorder %v242, %v248
    %vm261 = vcmp.ne.s32.totalorder %v243, %v248
    %vm262 = vcmp.ne.s32.totalorder %v244, %v248
    %vm263 = vcmp.ne.s32.totalorder %v245, %v248
    %vm264 = vcmp.ne.s32.totalorder %v246, %v248
    %v265 = vld [vmem:[%s0] sm:$0xff]
    %v266 = vld [vmem:[%s0 + $0x8] sm:$0xff]
    %v267 = vld [vmem:[%s0 + $0x10] sm:$0xff]
    %v268 = vld [vmem:[%s0 + $0x18] sm:$0xff]
    %v269 = vld [vmem:[%s0 + $0x20] sm:$0xff]
    %v270 = vld [vmem:[%s0 + $0x28] sm:$0xff]
    %v271 = vld [vmem:[%s0 + $0x30] sm:$0xff]
    %v272 = vld [vmem:[%s0 + $0x38] sm:$0xff]
    %v273 = vld [vmem:[%s0 + $0x40] sm:$0xff]
    %v274 = vld [vmem:[%s0 + $0x48] sm:$0xff]
    %v275 = vld [vmem:[%s0 + $0x50] sm:$0xff]
    %v276 = vld [vmem:[%s0 + $0x58] sm:$0xff]
    %v277 = vld [vmem:[%s0 + $0x60] sm:$0xff]
    %v278 = vld [vmem:[%s0 + $0x68] sm:$0xff]
    %v279 = vld [vmem:[%s0 + $0x70] sm:$0xff]
    %v280 = vld [vmem:[%s0 + $0x78] sm:$0xff]
    %v281 = vld [vmem:[%s1] sm:$0x1]
    %282 = vset.pattern.permute.xlu0 0
    %283 = vperm.xlu0 %282, %v265
    %v284 = vpop.permute.xlu0 %283
    %285 = vset.pattern.permute.xlu0 0
    %286 = vperm.xlu0 %285, %v266
    %v287 = vpop.permute.xlu0 %286
    %288 = vset.pattern.permute.xlu0 0
    %289 = vperm.xlu0 %288, %v267
    %v290 = vpop.permute.xlu0 %289
    %291 = vset.pattern.permute.xlu0 0
    %292 = vperm.xlu0 %291, %v268
    %v293 = vpop.permute.xlu0 %292
    %294 = vset.pattern.permute.xlu0 0
    %295 = vperm.xlu0 %294, %v269
    %v296 = vpop.permute.xlu0 %295
    %297 = vset.pattern.permute.xlu0 0
    %298 = vperm.xlu0 %297, %v270
    %v299 = vpop.permute.xlu0 %298
    %300 = vset.pattern.permute.xlu0 0
    %301 = vperm.xlu0 %300, %v271
    %v302 = vpop.permute.xlu0 %301
    %303 = vset.pattern.permute.xlu0 0
    %304 = vperm.xlu0 %303, %v272
    %v305 = vpop.permute.xlu0 %304
    %306 = vset.pattern.permute.xlu0 0
    %307 = vperm.xlu0 %306, %v273
    %v308 = vpop.permute.xlu0 %307
    %309 = vset.pattern.permute.xlu0 0
    %310 = vperm.xlu0 %309, %v274
    %v311 = vpop.permute.xlu0 %310
    %312 = vset.pattern.permute.xlu0 0
    %313 = vperm.xlu0 %312, %v275
    %v314 = vpop.permute.xlu0 %313
    %315 = vset.pattern.permute.xlu0 0
    %316 = vperm.xlu0 %315, %v276
    %v317 = vpop.permute.xlu0 %316
    %318 = vset.pattern.permute.xlu0 0
    %319 = vperm.xlu0 %318, %v277
    %v320 = vpop.permute.xlu0 %319
    %321 = vset.pattern.permute.xlu0 0
    %322 = vperm.xlu0 %321, %v278
    %v323 = vpop.permute.xlu0 %322
    %324 = vset.pattern.permute.xlu0 0
    %325 = vperm.xlu0 %324, %v279
    %v326 = vpop.permute.xlu0 %325
    %327 = vset.pattern.permute.xlu0 0
    %328 = vperm.xlu0 %327, %v280
    %v329 = vpop.permute.xlu0 %328
    %v330 = vlaneseq
    %v331 = vshrl.u32 %v330, 7
    %v332 = vsub.s32 0, %v331
    %v333 = vrot.slane %v281, %v332
    %vm334 = vcmp.eq.s32.totalorder %v284, %v333
    %vm335 = vcmp.eq.s32.totalorder %v287, %v333
    %vm336 = vcmp.eq.s32.totalorder %v290, %v333
    %vm337 = vcmp.eq.s32.totalorder %v293, %v333
    %vm338 = vcmp.eq.s32.totalorder %v296, %v333
    %vm339 = vcmp.eq.s32.totalorder %v299, %v333
    %vm340 = vcmp.eq.s32.totalorder %v302, %v333
    %vm341 = vcmp.eq.s32.totalorder %v305, %v333
    %vm342 = vcmp.eq.s32.totalorder %v308, %v333
    %vm343 = vcmp.eq.s32.totalorder %v311, %v333
    %vm344 = vcmp.eq.s32.totalorder %v314, %v333
    %vm345 = vcmp.eq.s32.totalorder %v317, %v333
    %vm346 = vcmp.eq.s32.totalorder %v320, %v333
    %vm347 = vcmp.eq.s32.totalorder %v323, %v333
    %vm348 = vcmp.eq.s32.totalorder %v326, %v333
    %vm349 = vcmp.eq.s32.totalorder %v329, %v333
    %vm350 = vcmp.lt.s32.totalorder %v248, 8
    %vm351 = vmand %vm249, %vm350
    %vm352 = vmand %vm250, %vm350
    %vm353 = vmand %vm251, %vm350
    %vm354 = vmand %vm252, %vm350
    %vm355 = vmand %vm253, %vm350
    %vm356 = vmand %vm254, %vm350
    %vm357 = vmand %vm255, %vm350
    %vm358 = vmand %vm256, %vm350
    %vm359 = vmand %vm257, %vm350
    %vm360 = vmand %vm258, %vm350
    %vm361 = vmand %vm259, %vm350
    %vm362 = vmand %vm260, %vm350
    %vm363 = vmand %vm261, %vm350
    %vm364 = vmand %vm262, %vm350
    %vm365 = vmand %vm263, %vm350
    %vm366 = vmand %vm264, %vm350
    %vm367 = vmand %vm334, %vm351
    %vm368 = vmand %vm335, %vm352
    %vm369 = vmand %vm336, %vm353
    %vm370 = vmand %vm337, %vm354
    %vm371 = vmand %vm338, %vm355
    %vm372 = vmand %vm339, %vm356
    %vm373 = vmand %vm340, %vm357
    %vm374 = vmand %vm341, %vm358
    %vm375 = vmand %vm342, %vm359
    %vm376 = vmand %vm343, %vm360
    %vm377 = vmand %vm344, %vm361
    %vm378 = vmand %vm345, %vm362
    %vm379 = vmand %vm346, %vm363
    %vm380 = vmand %vm347, %vm364
    %vm381 = vmand %vm348, %vm365
    %vm382 = vmand %vm349, %vm366
    %383 = vmax.xlane.f32.xlu0 %v197
    %v384 = vpop.xlane.xlu0 %383
    %385 = vmax.xlane.f32.xlu0 %v198
    %v386 = vpop.xlane.xlu0 %385
    %387 = vmax.xlane.f32.xlu0 %v199
    %v388 = vpop.xlane.xlu0 %387
    %389 = vmax.xlane.f32.xlu0 %v200
    %v390 = vpop.xlane.xlu0 %389
    %391 = vmax.xlane.f32.xlu0 %v201
    %v392 = vpop.xlane.xlu0 %391
    %393 = vmax.xlane.f32.xlu0 %v202
    %v394 = vpop.xlane.xlu0 %393
    %395 = vmax.xlane.f32.xlu0 %v203
    %v396 = vpop.xlane.xlu0 %395
    %397 = vmax.xlane.f32.xlu0 %v204
    %v398 = vpop.xlane.xlu0 %397
    %399 = vmax.xlane.f32.xlu0 %v205
    %v400 = vpop.xlane.xlu0 %399
    %401 = vmax.xlane.f32.xlu0 %v206
    %v402 = vpop.xlane.xlu0 %401
    %403 = vmax.xlane.f32.xlu0 %v207
    %v404 = vpop.xlane.xlu0 %403
    %405 = vmax.xlane.f32.xlu0 %v208
    %v406 = vpop.xlane.xlu0 %405
    %407 = vmax.xlane.f32.xlu0 %v209
    %v408 = vpop.xlane.xlu0 %407
    %409 = vmax.xlane.f32.xlu0 %v210
    %v410 = vpop.xlane.xlu0 %409
    %411 = vmax.xlane.f32.xlu0 %v211
    %v412 = vpop.xlane.xlu0 %411
    %413 = vmax.xlane.f32.xlu0 %v212
    %v414 = vpop.xlane.xlu0 %413
    %v415 = vsub.f32 %v197, %v384
    %v416 = vsub.f32 %v198, %v386
    %v417 = vsub.f32 %v199, %v388
    %v418 = vsub.f32 %v200, %v390
    %v419 = vsub.f32 %v201, %v392
    %v420 = vsub.f32 %v202, %v394
    %v421 = vsub.f32 %v203, %v396
    %v422 = vsub.f32 %v204, %v398
    %v423 = vsub.f32 %v205, %v400
    %v424 = vsub.f32 %v206, %v402
    %v425 = vsub.f32 %v207, %v404
    %v426 = vsub.f32 %v208, %v406
    %v427 = vsub.f32 %v209, %v408
    %v428 = vsub.f32 %v210, %v410
    %v429 = vsub.f32 %v211, %v412
    %v430 = vsub.f32 %v212, %v414
    %v431 = vmul.f32 %v415, 1.442695
    %v432 = vpow.pop %v431
    %v433 = vmul.f32 %v416, 1.442695
    %v434 = vpow.pop %v433
    %v435 = vmul.f32 %v417, 1.442695
    %v436 = vpow.pop %v435
    %v437 = vmul.f32 %v418, 1.442695
    %v438 = vpow.pop %v437
    %v439 = vmul.f32 %v419, 1.442695
    %v440 = vpow.pop %v439
    %v441 = vmul.f32 %v420, 1.442695
    %v442 = vpow.pop %v441
    %v443 = vmul.f32 %v421, 1.442695
    %v444 = vpow.pop %v443
    %v445 = vmul.f32 %v422, 1.442695
    %v446 = vpow.pop %v445
    %v447 = vmul.f32 %v423, 1.442695
    %v448 = vpow.pop %v447
    %v449 = vmul.f32 %v424, 1.442695
    %v450 = vpow.pop %v449
    %v451 = vmul.f32 %v425, 1.442695
    %v452 = vpow.pop %v451
    %v453 = vmul.f32 %v426, 1.442695
    %v454 = vpow.pop %v453
    %v455 = vmul.f32 %v427, 1.442695
    %v456 = vpow.pop %v455
    %v457 = vmul.f32 %v428, 1.442695
    %v458 = vpow.pop %v457
    %v459 = vmul.f32 %v429, 1.442695
    %v460 = vpow.pop %v459
    %v461 = vmul.f32 %v430, 1.442695
    %v462 = vpow.pop %v461
    %v463 = vsel %vm351, %v432, 0.0
    %v464 = vsel %vm352, %v434, 0.0
    %v465 = vsel %vm353, %v436, 0.0
    %v466 = vsel %vm354, %v438, 0.0
    %v467 = vsel %vm355, %v440, 0.0
    %v468 = vsel %vm356, %v442, 0.0
    %v469 = vsel %vm357, %v444, 0.0
    %v470 = vsel %vm358, %v446, 0.0
    %v471 = vsel %vm359, %v448, 0.0
    %v472 = vsel %vm360, %v450, 0.0
    %v473 = vsel %vm361, %v452, 0.0
    %v474 = vsel %vm362, %v454, 0.0
    %v475 = vsel %vm363, %v456, 0.0
    %v476 = vsel %vm364, %v458, 0.0
    %v477 = vsel %vm365, %v460, 0.0
    %v478 = vsel %vm366, %v462, 0.0
    %479 = vadd.xlane.f32.xlu0 %v463
    %v480 = vpop.xlane.xlu0 %479
    %481 = vadd.xlane.f32.xlu0 %v464
    %v482 = vpop.xlane.xlu0 %481
    %483 = vadd.xlane.f32.xlu0 %v465
    %v484 = vpop.xlane.xlu0 %483
    %485 = vadd.xlane.f32.xlu0 %v466
    %v486 = vpop.xlane.xlu0 %485
    %487 = vadd.xlane.f32.xlu0 %v467
    %v488 = vpop.xlane.xlu0 %487
    %489 = vadd.xlane.f32.xlu0 %v468
    %v490 = vpop.xlane.xlu0 %489
    %491 = vadd.xlane.f32.xlu0 %v469
    %v492 = vpop.xlane.xlu0 %491
    %493 = vadd.xlane.f32.xlu0 %v470
    %v494 = vpop.xlane.xlu0 %493
    %495 = vadd.xlane.f32.xlu0 %v471
    %v496 = vpop.xlane.xlu0 %495
    %497 = vadd.xlane.f32.xlu0 %v472
    %v498 = vpop.xlane.xlu0 %497
    %499 = vadd.xlane.f32.xlu0 %v473
    %v500 = vpop.xlane.xlu0 %499
    %501 = vadd.xlane.f32.xlu0 %v474
    %v502 = vpop.xlane.xlu0 %501
    %503 = vadd.xlane.f32.xlu0 %v475
    %v504 = vpop.xlane.xlu0 %503
    %505 = vadd.xlane.f32.xlu0 %v476
    %v506 = vpop.xlane.xlu0 %505
    %507 = vadd.xlane.f32.xlu0 %v477
    %v508 = vpop.xlane.xlu0 %507
    %509 = vadd.xlane.f32.xlu0 %v478
    %v510 = vpop.xlane.xlu0 %509
    %v511 = vmax.f32 %v480, 1e-30
    %v512 = vmax.f32 %v482, 1e-30
    %v513 = vmax.f32 %v484, 1e-30
    %v514 = vmax.f32 %v486, 1e-30
    %v515 = vmax.f32 %v488, 1e-30
    %v516 = vmax.f32 %v490, 1e-30
    %v517 = vmax.f32 %v492, 1e-30
    %v518 = vmax.f32 %v494, 1e-30
    %v519 = vmax.f32 %v496, 1e-30
    %v520 = vmax.f32 %v498, 1e-30
    %v521 = vmax.f32 %v500, 1e-30
    %v522 = vmax.f32 %v502, 1e-30
    %v523 = vmax.f32 %v504, 1e-30
    %v524 = vmax.f32 %v506, 1e-30
    %v525 = vmax.f32 %v508, 1e-30
    %v526 = vmax.f32 %v510, 1e-30
    %v527 = vsel %vm367, 1.0, 0.0
    %v528 = vsel %vm368, 1.0, 0.0
    %v529 = vsel %vm369, 1.0, 0.0
    %v530 = vsel %vm370, 1.0, 0.0
    %v531 = vsel %vm371, 1.0, 0.0
    %v532 = vsel %vm372, 1.0, 0.0
    %v533 = vsel %vm373, 1.0, 0.0
    %v534 = vsel %vm374, 1.0, 0.0
    %v535 = vsel %vm375, 1.0, 0.0
    %v536 = vsel %vm376, 1.0, 0.0
    %v537 = vsel %vm377, 1.0, 0.0
    %v538 = vsel %vm378, 1.0, 0.0
    %v539 = vsel %vm379, 1.0, 0.0
    %v540 = vsel %vm380, 1.0, 0.0
    %v541 = vsel %vm381, 1.0, 0.0
    %v542 = vsel %vm382, 1.0, 0.0
    %543 = vadd.xlane.f32.xlu0 %v527
    %v544 = vpop.xlane.xlu0 %543
    %545 = vadd.xlane.f32.xlu0 %v528
    %v546 = vpop.xlane.xlu0 %545
    %547 = vadd.xlane.f32.xlu0 %v529
    %v548 = vpop.xlane.xlu0 %547
    %549 = vadd.xlane.f32.xlu0 %v530
    %v550 = vpop.xlane.xlu0 %549
    %551 = vadd.xlane.f32.xlu0 %v531
    %v552 = vpop.xlane.xlu0 %551
    %553 = vadd.xlane.f32.xlu0 %v532
    %v554 = vpop.xlane.xlu0 %553
    %555 = vadd.xlane.f32.xlu0 %v533
    %v556 = vpop.xlane.xlu0 %555
    %557 = vadd.xlane.f32.xlu0 %v534
    %v558 = vpop.xlane.xlu0 %557
    %559 = vadd.xlane.f32.xlu0 %v535
    %v560 = vpop.xlane.xlu0 %559
    %561 = vadd.xlane.f32.xlu0 %v536
    %v562 = vpop.xlane.xlu0 %561
    %563 = vadd.xlane.f32.xlu0 %v537
    %v564 = vpop.xlane.xlu0 %563
    %565 = vadd.xlane.f32.xlu0 %v538
    %v566 = vpop.xlane.xlu0 %565
    %567 = vadd.xlane.f32.xlu0 %v539
    %v568 = vpop.xlane.xlu0 %567
    %569 = vadd.xlane.f32.xlu0 %v540
    %v570 = vpop.xlane.xlu0 %569
    %571 = vadd.xlane.f32.xlu0 %v541
    %v572 = vpop.xlane.xlu0 %571
    %573 = vadd.xlane.f32.xlu0 %v542
    %v574 = vpop.xlane.xlu0 %573
    %v575 = vsel %vm367, %v415, 0.0
    %v576 = vsel %vm368, %v416, 0.0
    %v577 = vsel %vm369, %v417, 0.0
    %v578 = vsel %vm370, %v418, 0.0
    %v579 = vsel %vm371, %v419, 0.0
    %v580 = vsel %vm372, %v420, 0.0
    %v581 = vsel %vm373, %v421, 0.0
    %v582 = vsel %vm374, %v422, 0.0
    %v583 = vsel %vm375, %v423, 0.0
    %v584 = vsel %vm376, %v424, 0.0
    %v585 = vsel %vm377, %v425, 0.0
    %v586 = vsel %vm378, %v426, 0.0
    %v587 = vsel %vm379, %v427, 0.0
    %v588 = vsel %vm380, %v428, 0.0
    %v589 = vsel %vm381, %v429, 0.0
    %v590 = vsel %vm382, %v430, 0.0
    %591 = vadd.xlane.f32.xlu0 %v575
    %v592 = vpop.xlane.xlu0 %591
    %593 = vadd.xlane.f32.xlu0 %v576
    %v594 = vpop.xlane.xlu0 %593
    %595 = vadd.xlane.f32.xlu0 %v577
    %v596 = vpop.xlane.xlu0 %595
    %597 = vadd.xlane.f32.xlu0 %v578
    %v598 = vpop.xlane.xlu0 %597
    %599 = vadd.xlane.f32.xlu0 %v579
    %v600 = vpop.xlane.xlu0 %599
    %601 = vadd.xlane.f32.xlu0 %v580
    %v602 = vpop.xlane.xlu0 %601
    %603 = vadd.xlane.f32.xlu0 %v581
    %v604 = vpop.xlane.xlu0 %603
    %605 = vadd.xlane.f32.xlu0 %v582
    %v606 = vpop.xlane.xlu0 %605
    %607 = vadd.xlane.f32.xlu0 %v583
    %v608 = vpop.xlane.xlu0 %607
    %609 = vadd.xlane.f32.xlu0 %v584
    %v610 = vpop.xlane.xlu0 %609
    %611 = vadd.xlane.f32.xlu0 %v585
    %v612 = vpop.xlane.xlu0 %611
    %613 = vadd.xlane.f32.xlu0 %v586
    %v614 = vpop.xlane.xlu0 %613
    %615 = vadd.xlane.f32.xlu0 %v587
    %v616 = vpop.xlane.xlu0 %615
    %617 = vadd.xlane.f32.xlu0 %v588
    %v618 = vpop.xlane.xlu0 %617
    %619 = vadd.xlane.f32.xlu0 %v589
    %v620 = vpop.xlane.xlu0 %619
    %621 = vadd.xlane.f32.xlu0 %v590
    %v622 = vpop.xlane.xlu0 %621
    %v623 = vlog2.pop %v511
    %v624 = vmul.f32 %v623, 0.6931472
    %v625 = vlog2.pop %v512
    %v626 = vmul.f32 %v625, 0.6931472
    %v627 = vlog2.pop %v513
    %v628 = vmul.f32 %v627, 0.6931472
    %v629 = vlog2.pop %v514
    %v630 = vmul.f32 %v629, 0.6931472
    %v631 = vlog2.pop %v515
    %v632 = vmul.f32 %v631, 0.6931472
    %v633 = vlog2.pop %v516
    %v634 = vmul.f32 %v633, 0.6931472
    %v635 = vlog2.pop %v517
    %v636 = vmul.f32 %v635, 0.6931472
    %v637 = vlog2.pop %v518
    %v638 = vmul.f32 %v637, 0.6931472
    %v639 = vlog2.pop %v519
    %v640 = vmul.f32 %v639, 0.6931472
    %v641 = vlog2.pop %v520
    %v642 = vmul.f32 %v641, 0.6931472
    %v643 = vlog2.pop %v521
    %v644 = vmul.f32 %v643, 0.6931472
    %v645 = vlog2.pop %v522
    %v646 = vmul.f32 %v645, 0.6931472
    %v647 = vlog2.pop %v523
    %v648 = vmul.f32 %v647, 0.6931472
    %v649 = vlog2.pop %v524
    %v650 = vmul.f32 %v649, 0.6931472
    %v651 = vlog2.pop %v525
    %v652 = vmul.f32 %v651, 0.6931472
    %v653 = vlog2.pop %v526
    %v654 = vmul.f32 %v653, 0.6931472
    %v655 = vmul.f32 %v544, %v624
    %v656 = vmul.f32 %v546, %v626
    %v657 = vmul.f32 %v548, %v628
    %v658 = vmul.f32 %v550, %v630
    %v659 = vmul.f32 %v552, %v632
    %v660 = vmul.f32 %v554, %v634
    %v661 = vmul.f32 %v556, %v636
    %v662 = vmul.f32 %v558, %v638
    %v663 = vmul.f32 %v560, %v640
    %v664 = vmul.f32 %v562, %v642
    %v665 = vmul.f32 %v564, %v644
    %v666 = vmul.f32 %v566, %v646
    %v667 = vmul.f32 %v568, %v648
    %v668 = vmul.f32 %v570, %v650
    %v669 = vmul.f32 %v572, %v652
    %v670 = vmul.f32 %v574, %v654
    %v671 = vsub.f32 %v592, %v655
    %v672 = vsub.f32 %v594, %v656
    %v673 = vsub.f32 %v596, %v657
    %v674 = vsub.f32 %v598, %v658
    %v675 = vsub.f32 %v600, %v659
    %v676 = vsub.f32 %v602, %v660
    %v677 = vsub.f32 %v604, %v661
    %v678 = vsub.f32 %v606, %v662
    %v679 = vsub.f32 %v608, %v663
    %v680 = vsub.f32 %v610, %v664
    %v681 = vsub.f32 %v612, %v665
    %v682 = vsub.f32 %v614, %v666
    %v683 = vsub.f32 %v616, %v667
    %v684 = vsub.f32 %v618, %v668
    %v685 = vsub.f32 %v620, %v669
    %v686 = vsub.f32 %v622, %v670
    %v687 = vmax.f32 %v544, 1.0
    %v688 = vmax.f32 %v546, 1.0
    %v689 = vmax.f32 %v548, 1.0
    %v690 = vmax.f32 %v550, 1.0
    %v691 = vmax.f32 %v552, 1.0
    %v692 = vmax.f32 %v554, 1.0
    %v693 = vmax.f32 %v556, 1.0
    %v694 = vmax.f32 %v558, 1.0
    %v695 = vmax.f32 %v560, 1.0
    %v696 = vmax.f32 %v562, 1.0
    %v697 = vmax.f32 %v564, 1.0
    %v698 = vmax.f32 %v566, 1.0
    %v699 = vmax.f32 %v568, 1.0
    %v700 = vmax.f32 %v570, 1.0
    %v701 = vmax.f32 %v572, 1.0
    %v702 = vmax.f32 %v574, 1.0
    %v703 = vrcp.pop %v687
    %v704 = vmul.f32 %v671, %v703
    %v705 = vrcp.pop %v688
    %v706 = vmul.f32 %v672, %v705
    %v707 = vrcp.pop %v689
    %v708 = vmul.f32 %v673, %v707
    %v709 = vrcp.pop %v690
    %v710 = vmul.f32 %v674, %v709
    %v711 = vrcp.pop %v691
    %v712 = vmul.f32 %v675, %v711
    %v713 = vrcp.pop %v692
    %v714 = vmul.f32 %v676, %v713
    %v715 = vrcp.pop %v693
    %v716 = vmul.f32 %v677, %v715
    %v717 = vrcp.pop %v694
    %v718 = vmul.f32 %v678, %v717
    %v719 = vrcp.pop %v695
    %v720 = vmul.f32 %v679, %v719
    %v721 = vrcp.pop %v696
    %v722 = vmul.f32 %v680, %v721
    %v723 = vrcp.pop %v697
    %v724 = vmul.f32 %v681, %v723
    %v725 = vrcp.pop %v698
    %v726 = vmul.f32 %v682, %v725
    %v727 = vrcp.pop %v699
    %v728 = vmul.f32 %v683, %v727
    %v729 = vrcp.pop %v700
    %v730 = vmul.f32 %v684, %v729
    %v731 = vrcp.pop %v701
    %v732 = vmul.f32 %v685, %v731
    %v733 = vrcp.pop %v702
    %v734 = vmul.f32 %v686, %v733
    %v735 = vsub.f32 0.0, %v704
    %v736 = vsub.f32 0.0, %v706
    %v737 = vsub.f32 0.0, %v708
    %v738 = vsub.f32 0.0, %v710
    %v739 = vsub.f32 0.0, %v712
    %v740 = vsub.f32 0.0, %v714
    %v741 = vsub.f32 0.0, %v716
    %v742 = vsub.f32 0.0, %v718
    %v743 = vsub.f32 0.0, %v720
    %v744 = vsub.f32 0.0, %v722
    %v745 = vsub.f32 0.0, %v724
    %v746 = vsub.f32 0.0, %v726
    %v747 = vsub.f32 0.0, %v728
    %v748 = vsub.f32 0.0, %v730
    %v749 = vsub.f32 0.0, %v732
    %v750 = vsub.f32 0.0, %v734
    %v751 = vmul.f32 %v735, 0.07
    %v752 = vmul.f32 %v736, 0.07
    %v753 = vmul.f32 %v737, 0.07
    %v754 = vmul.f32 %v738, 0.07
    %v755 = vmul.f32 %v739, 0.07
    %v756 = vmul.f32 %v740, 0.07
    %v757 = vmul.f32 %v741, 0.07
    %v758 = vmul.f32 %v742, 0.07
    %v759 = vmul.f32 %v743, 0.07
    %v760 = vmul.f32 %v744, 0.07
    %v761 = vmul.f32 %v745, 0.07
    %v762 = vmul.f32 %v746, 0.07
    %v763 = vmul.f32 %v747, 0.07
    %v764 = vmul.f32 %v748, 0.07
    %v765 = vmul.f32 %v749, 0.07
    %v766 = vmul.f32 %v750, 0.07
    %v783 = vlaneseq
    %v784 = vshrl.u32 %v783, 7
    %v785 = vsub.s32 %v248, %v784
    %v786 = vrot.slane %v751, %v785
    %v787 = vadd.s32 %v248, 4294967288
    %v788 = vlaneseq
    %v789 = vshrl.u32 %v788, 7
    %v790 = vsub.s32 %v787, %v789
    %v791 = vrot.slane %v752, %v790
    %vm792 = vcmask 130112
    %v793 = vsel %vm792, %v791, %v786
    %v794 = vadd.s32 %v248, 4294967280
    %v795 = vlaneseq
    %v796 = vshrl.u32 %v795, 7
    %v797 = vsub.s32 %v794, %v796
    %v798 = vrot.slane %v753, %v797
    %vm799 = vcmask 195712
    %v800 = vsel %vm799, %v798, %v793
    %v801 = vadd.s32 %v248, 4294967272
    %v802 = vlaneseq
    %v803 = vshrl.u32 %v802, 7
    %v804 = vsub.s32 %v801, %v803
    %v805 = vrot.slane %v754, %v804
    %vm806 = vcmask 261312
    %v807 = vsel %vm806, %v805, %v800
    %v808 = vadd.s32 %v248, 4294967264
    %v809 = vlaneseq
    %v810 = vshrl.u32 %v809, 7
    %v811 = vsub.s32 %v808, %v810
    %v812 = vrot.slane %v755, %v811
    %vm813 = vcmask 326912
    %v814 = vsel %vm813, %v812, %v807
    %v815 = vadd.s32 %v248, 4294967256
    %v816 = vlaneseq
    %v817 = vshrl.u32 %v816, 7
    %v818 = vsub.s32 %v815, %v817
    %v819 = vrot.slane %v756, %v818
    %vm820 = vcmask 392512
    %v821 = vsel %vm820, %v819, %v814
    %v822 = vadd.s32 %v248, 4294967248
    %v823 = vlaneseq
    %v824 = vshrl.u32 %v823, 7
    %v825 = vsub.s32 %v822, %v824
    %v826 = vrot.slane %v757, %v825
    %vm827 = vcmask 458112
    %v828 = vsel %vm827, %v826, %v821
    %v829 = vadd.s32 %v248, 4294967240
    %v830 = vlaneseq
    %v831 = vshrl.u32 %v830, 7
    %v832 = vsub.s32 %v829, %v831
    %v833 = vrot.slane %v758, %v832
    %vm834 = vcmask 523712
    %v835 = vsel %vm834, %v833, %v828
    %v836 = vadd.s32 %v248, 4294967232
    %v837 = vlaneseq
    %v838 = vshrl.u32 %v837, 7
    %v839 = vsub.s32 %v836, %v838
    %v840 = vrot.slane %v759, %v839
    %vm841 = vcmask 589312
    %v842 = vsel %vm841, %v840, %v835
    %v843 = vadd.s32 %v248, 4294967224
    %v844 = vlaneseq
    %v845 = vshrl.u32 %v844, 7
    %v846 = vsub.s32 %v843, %v845
    %v847 = vrot.slane %v760, %v846
    %vm848 = vcmask 654912
    %v849 = vsel %vm848, %v847, %v842
    %v850 = vadd.s32 %v248, 4294967216
    %v851 = vlaneseq
    %v852 = vshrl.u32 %v851, 7
    %v853 = vsub.s32 %v850, %v852
    %v854 = vrot.slane %v761, %v853
    %vm855 = vcmask 720512
    %v856 = vsel %vm855, %v854, %v849
    %v857 = vadd.s32 %v248, 4294967208
    %v858 = vlaneseq
    %v859 = vshrl.u32 %v858, 7
    %v860 = vsub.s32 %v857, %v859
    %v861 = vrot.slane %v762, %v860
    %vm862 = vcmask 786112
    %v863 = vsel %vm862, %v861, %v856
    %v864 = vadd.s32 %v248, 4294967200
    %v865 = vlaneseq
    %v866 = vshrl.u32 %v865, 7
    %v867 = vsub.s32 %v864, %v866
    %v868 = vrot.slane %v763, %v867
    %vm869 = vcmask 851712
    %v870 = vsel %vm869, %v868, %v863
    %v871 = vadd.s32 %v248, 4294967192
    %v872 = vlaneseq
    %v873 = vshrl.u32 %v872, 7
    %v874 = vsub.s32 %v871, %v873
    %v875 = vrot.slane %v764, %v874
    %vm876 = vcmask 917312
    %v877 = vsel %vm876, %v875, %v870
    %v878 = vadd.s32 %v248, 4294967184
    %v879 = vlaneseq
    %v880 = vshrl.u32 %v879, 7
    %v881 = vsub.s32 %v878, %v880
    %v882 = vrot.slane %v765, %v881
    %vm883 = vcmask 982912
    %v884 = vsel %vm883, %v882, %v877
    %v885 = vadd.s32 %v248, 4294967176
    %v886 = vlaneseq
    %v887 = vshrl.u32 %v886, 7
    %v888 = vsub.s32 %v885, %v887
    %v889 = vrot.slane %v766, %v888
    %vm890 = vcmask 1048512
    %v891 = vsel %vm890, %v889, %v884
    %893 = vst [vmem:[#allocation2] sm:$0x1] %v891
    %v910 = vlaneseq
    %v911 = vshrl.u32 %v910, 7
    %v912 = vsub.s32 %v248, %v911
    %v913 = vrot.slane %v544, %v912
    %v914 = vlaneseq
    %v915 = vshrl.u32 %v914, 7
    %v916 = vsub.s32 %v787, %v915
    %v917 = vrot.slane %v546, %v916
    %v918 = vsel %vm792, %v917, %v913
    %v919 = vlaneseq
    %v920 = vshrl.u32 %v919, 7
    %v921 = vsub.s32 %v794, %v920
    %v922 = vrot.slane %v548, %v921
    %v923 = vsel %vm799, %v922, %v918
    %v924 = vlaneseq
    %v925 = vshrl.u32 %v924, 7
    %v926 = vsub.s32 %v801, %v925
    %v927 = vrot.slane %v550, %v926
    %v928 = vsel %vm806, %v927, %v923
    %v929 = vlaneseq
    %v930 = vshrl.u32 %v929, 7
    %v931 = vsub.s32 %v808, %v930
    %v932 = vrot.slane %v552, %v931
    %v933 = vsel %vm813, %v932, %v928
    %v934 = vlaneseq
    %v935 = vshrl.u32 %v934, 7
    %v936 = vsub.s32 %v815, %v935
    %v937 = vrot.slane %v554, %v936
    %v938 = vsel %vm820, %v937, %v933
    %v939 = vlaneseq
    %v940 = vshrl.u32 %v939, 7
    %v941 = vsub.s32 %v822, %v940
    %v942 = vrot.slane %v556, %v941
    %v943 = vsel %vm827, %v942, %v938
    %v944 = vlaneseq
    %v945 = vshrl.u32 %v944, 7
    %v946 = vsub.s32 %v829, %v945
    %v947 = vrot.slane %v558, %v946
    %v948 = vsel %vm834, %v947, %v943
    %v949 = vlaneseq
    %v950 = vshrl.u32 %v949, 7
    %v951 = vsub.s32 %v836, %v950
    %v952 = vrot.slane %v560, %v951
    %v953 = vsel %vm841, %v952, %v948
    %v954 = vlaneseq
    %v955 = vshrl.u32 %v954, 7
    %v956 = vsub.s32 %v843, %v955
    %v957 = vrot.slane %v562, %v956
    %v958 = vsel %vm848, %v957, %v953
    %v959 = vlaneseq
    %v960 = vshrl.u32 %v959, 7
    %v961 = vsub.s32 %v850, %v960
    %v962 = vrot.slane %v564, %v961
    %v963 = vsel %vm855, %v962, %v958
    %v964 = vlaneseq
    %v965 = vshrl.u32 %v964, 7
    %v966 = vsub.s32 %v857, %v965
    %v967 = vrot.slane %v566, %v966
    %v968 = vsel %vm862, %v967, %v963
    %v969 = vlaneseq
    %v970 = vshrl.u32 %v969, 7
    %v971 = vsub.s32 %v864, %v970
    %v972 = vrot.slane %v568, %v971
    %v973 = vsel %vm869, %v972, %v968
    %v974 = vlaneseq
    %v975 = vshrl.u32 %v974, 7
    %v976 = vsub.s32 %v871, %v975
    %v977 = vrot.slane %v570, %v976
    %v978 = vsel %vm876, %v977, %v973
    %v979 = vlaneseq
    %v980 = vshrl.u32 %v979, 7
    %v981 = vsub.s32 %v878, %v980
    %v982 = vrot.slane %v572, %v981
    %v983 = vsel %vm883, %v982, %v978
    %v984 = vlaneseq
    %v985 = vshrl.u32 %v984, 7
    %v986 = vsub.s32 %v885, %v985
    %v987 = vrot.slane %v574, %v986
    %v988 = vsel %vm890, %v987, %v983
    %990 = vst [vmem:[#allocation4] sm:$0x1] %v988
    // Predicated region
    $region14: #{tpu_custom_call.1} parent=1 // pred_check
      _
    $region15: #{tpu_custom_call.1} parent=1 // pred_check_branch
      %992 = sbr.rel (0) target = $region17
    $region16: #{tpu_custom_call.1} parent=1 // pred_region
      %s994 = ssub.s32 16, 16
      %995 = vsyncadd [#allocation3], %s994
      %s997 = sshll.u32 [#allocation2], 4
      %s998 = int_to_ptr.vmem [resolvable:$true] %s997
      %1000 = dma.vmem_to_hbm [thread:$0]  %s998, 16, %s3, [#allocation3]
    $region17: #{tpu_custom_call.1} parent=1 // pred_fallthru
      _
    // Predicated region
    $region18: #{tpu_custom_call.1} parent=1 // pred_check
      _
    $region19: #{tpu_custom_call.1} parent=1 // pred_check_branch
      %1002 = sbr.rel (0) target = $region21
    $region20: #{tpu_custom_call.1} parent=1 // pred_region
      %s1004 = ssub.s32 16, 16
      %1005 = vsyncadd [#allocation5], %s1004
      %s1007 = sshll.u32 [#allocation4], 4
      %s1008 = int_to_ptr.vmem [resolvable:$true] %s1007
      %1010 = dma.vmem_to_hbm [thread:$0]  %s1008, 16, %s4, [#allocation5]
    $region21: #{tpu_custom_call.1} parent=1 // pred_fallthru
      _
    // Predicated region
    $region22: #{tpu_custom_call.1} parent=1 // pred_check
      _
    $region23: #{tpu_custom_call.1} parent=1 // pred_check_branch
      %1012 = sbr.rel (0) target = $region25
    $region24: #{tpu_custom_call.1} parent=1 // pred_region
      %1013 = dma.done [#allocation3], 16
    $region25: #{tpu_custom_call.1} parent=1 // pred_fallthru
      _
    // Predicated region
    $region26: #{tpu_custom_call.1} parent=1 // pred_check
      _
    $region27: #{tpu_custom_call.1} parent=1 // pred_check_branch
      %1015 = sbr.rel (0) target = $region29
    $region28: #{tpu_custom_call.1} parent=1 // pred_region
      %1016 = dma.done [#allocation5], 16
    $region29: #{tpu_custom_call.1} parent=1 // pred_fallthru
      _
    %1017 = vsyncpa [#allocation3], 1
    %1018 = vsyncpa [#allocation5], 1

// kernel: tpu_custom_call.1
$region0: #{tpu_custom_call.1}
  #allocation0 [shape = 'u32[]', space=smem, size = 0x4, offset = 0x4, fixed_abs, tag = 'smem constant byte address 0x4 - core index']
  #allocation1 [shape = 'u32[144,128]{1,0:T(1,128)}', space=vmem, size = 0x12000, scoped, tag = 'internal scratch']
  %s0 = inlined_call_operand.vmem [shape: s32[128,1], index: 0, kind: input, shape index: {}]
  %s1 = inlined_call_operand.vmem [shape: s32[1,128], index: 1, kind: input, shape index: {}]
  %s2 = inlined_call_operand.vmem [shape: f32[128,128], index: 2, kind: input, shape index: {}]
  %s3 = inlined_call_operand.hbm [shape: f32[1,128], index: 3, kind: output, shape index: {0}]
  %s4 = inlined_call_operand.hbm [shape: f32[1,128], index: 4, kind: output, shape index: {1}]
  %5 = xla_tuple %s3, %s4
  %s6 = sld [smem:[#allocation0]]
  $region30: #{tpu_custom_call.1} parent=0
    _
  %s8 = ssub.s32 1, %s6
  %s9 = scalar_select 0, %s8, %s6
  $region1: #{tpu_custom_call.1} parent=0
    #allocation2 [shape = 'u8[512]{0}', space=vmem, size = 0x400, scoped, tag = 'output window, operand 0, single buffered']
    #allocation3 [shape = 's32[1]{0}', space=sflag, size = 0x4, scoped, tag = 'scoped memory for tpu_custom_call.1']
    #allocation4 [shape = 'u8[512]{0}', space=vmem, size = 0x400, scoped, tag = 'output window, operand 1, single buffered']
    #allocation5 [shape = 's32[1]{0}', space=sflag, size = 0x4, scoped, tag = 'scoped memory for tpu_custom_call.1']
    %10 = vsyncpa [#allocation3], 0
    %11 = vsyncpa [#allocation5], 0
    // Predicated region
    $region2: #{tpu_custom_call.1} parent=1 // pred_check
      _
    $region3: #{tpu_custom_call.1} parent=1 // pred_check_branch
      %13 = sbr.rel (0) target = $region5
    $region4: #{tpu_custom_call.1} parent=1 // pred_region
      _
    $region5: #{tpu_custom_call.1} parent=1 // pred_fallthru
      _
    // Predicated region
    $region6: #{tpu_custom_call.1} parent=1 // pred_check
      _
    $region7: #{tpu_custom_call.1} parent=1 // pred_check_branch
      %15 = sbr.rel (0) target = $region9
    $region8: #{tpu_custom_call.1} parent=1 // pred_region
      _
    $region9: #{tpu_custom_call.1} parent=1 // pred_fallthru
      _
    // Predicated region
    $region10: #{tpu_custom_call.1} parent=1 // pred_check
      _
    $region11: #{tpu_custom_call.1} parent=1 // pred_check_branch
      %17 = sbr.rel (0) target = $region13
    $region12: #{tpu_custom_call.1} parent=1 // pred_region
      _
    $region13: #{tpu_custom_call.1} parent=1 // pred_fallthru
      _
    %s18 = smul.u32 0, 128
    %s19 = scalar_lea.vmem %s2, %s18
    %v20 = vld [vmem:[%s19] sm:$0xff]
    %v21 = vld [vmem:[%s19 + $0x8] sm:$0xff]
    %v22 = vld [vmem:[%s19 + $0x10] sm:$0xff]
    %v23 = vld [vmem:[%s19 + $0x18] sm:$0xff]
    %v24 = vld [vmem:[%s19 + $0x20] sm:$0xff]
    %v25 = vld [vmem:[%s19 + $0x28] sm:$0xff]
    %v26 = vld [vmem:[%s19 + $0x30] sm:$0xff]
    %v27 = vld [vmem:[%s19 + $0x38] sm:$0xff]
    %v28 = vld [vmem:[%s19 + $0x40] sm:$0xff]
    %v29 = vld [vmem:[%s19 + $0x48] sm:$0xff]
    %v30 = vld [vmem:[%s19 + $0x50] sm:$0xff]
    %v31 = vld [vmem:[%s19 + $0x58] sm:$0xff]
    %v32 = vld [vmem:[%s19 + $0x60] sm:$0xff]
    %v33 = vld [vmem:[%s19 + $0x68] sm:$0xff]
    %v34 = vld [vmem:[%s19 + $0x70] sm:$0xff]
    %v35 = vld [vmem:[%s19 + $0x78] sm:$0xff]
    %v36 = vld [vmem:[%s2] sm:$0xff]
    %v37 = vld [vmem:[%s2 + $0x8] sm:$0xff]
    %v38 = vld [vmem:[%s2 + $0x10] sm:$0xff]
    %v39 = vld [vmem:[%s2 + $0x18] sm:$0xff]
    %v40 = vld [vmem:[%s2 + $0x20] sm:$0xff]
    %v41 = vld [vmem:[%s2 + $0x28] sm:$0xff]
    %v42 = vld [vmem:[%s2 + $0x30] sm:$0xff]
    %v43 = vld [vmem:[%s2 + $0x38] sm:$0xff]
    %v44 = vld [vmem:[%s2 + $0x40] sm:$0xff]
    %v45 = vld [vmem:[%s2 + $0x48] sm:$0xff]
    %v46 = vld [vmem:[%s2 + $0x50] sm:$0xff]
    %v47 = vld [vmem:[%s2 + $0x58] sm:$0xff]
    %v48 = vld [vmem:[%s2 + $0x60] sm:$0xff]
    %v49 = vld [vmem:[%s2 + $0x68] sm:$0xff]
    %v50 = vld [vmem:[%s2 + $0x70] sm:$0xff]
    %v51 = vld [vmem:[%s2 + $0x78] sm:$0xff]
    %52 = vmatprep.subr.mxu0 0.0
    %53 = vmatpush1.xpose.msra.mxu0 %v51
    %54 = vmatprep.subr.mxu0 0.0
    %55 = vmatpush1.xpose.msra.mxu0 %v50
    %56 = vmatprep.subr.mxu0 0.0
    %57 = vmatpush1.xpose.msra.mxu0 %v49
    %58 = vmatprep.subr.mxu0 0.0
    %59 = vmatpush1.xpose.msra.mxu0 %v48
    %60 = vmatprep.subr.mxu0 0.0
    %61 = vmatpush1.xpose.msra.mxu0 %v47
    %62 = vmatprep.subr.mxu0 0.0
    %63 = vmatpush1.xpose.msra.mxu0 %v46
    %64 = vmatprep.subr.mxu0 0.0
    %65 = vmatpush1.xpose.msra.mxu0 %v45
    %66 = vmatprep.subr.mxu0 0.0
    %67 = vmatpush1.xpose.msra.mxu0 %v44
    %68 = vmatprep.subr.mxu0 0.0
    %69 = vmatpush1.xpose.msra.mxu0 %v43
    %70 = vmatprep.subr.mxu0 0.0
    %71 = vmatpush1.xpose.msra.mxu0 %v42
    %72 = vmatprep.subr.mxu0 0.0
    %73 = vmatpush1.xpose.msra.mxu0 %v41
    %74 = vmatprep.subr.mxu0 0.0
    %75 = vmatpush1.xpose.msra.mxu0 %v40
    %76 = vmatprep.subr.mxu0 0.0
    %77 = vmatpush1.xpose.msra.mxu0 %v39
    %78 = vmatprep.subr.mxu0 0.0
    %79 = vmatpush1.xpose.msra.mxu0 %v38
    %80 = vmatprep.subr.mxu0 0.0
    %81 = vmatpush1.xpose.msra.mxu0 %v37
    %82 = vmatprep.subr.mxu0 0.0
    %83 = vmatpush1.xpose.msra.mxu0 %v36
    %84 = vmatprep.subr.mxu0 0.0
    %85 = vmatpush2.xpose.msra.mxu0 0.0
    %86 = vmatprep.subr.mxu0 0.0
    %87 = vmatpush2.xpose.msra.mxu0 0.0
    %88 = vmatprep.subr.mxu0 0.0
    %89 = vmatpush2.xpose.msra.mxu0 0.0
    %90 = vmatprep.subr.mxu0 0.0
    %91 = vmatpush2.xpose.msra.mxu0 0.0
    %92 = vmatprep.subr.mxu0 0.0
    %93 = vmatpush2.xpose.msra.mxu0 0.0
    %94 = vmatprep.subr.mxu0 0.0
    %95 = vmatpush2.xpose.msra.mxu0 0.0
    %96 = vmatprep.subr.mxu0 0.0
    %97 = vmatpush2.xpose.msra.mxu0 0.0
    %98 = vmatprep.subr.mxu0 0.0
    %99 = vmatpush2.xpose.msra.mxu0 0.0
    %100 = vmatprep.subr.mxu0 0.0
    %101 = vmatpush2.xpose.msra.mxu0 0.0
    %102 = vmatprep.subr.mxu0 0.0
    %103 = vmatpush2.xpose.msra.mxu0 0.0
    %104 = vmatprep.subr.mxu0 0.0
    %105 = vmatpush2.xpose.msra.mxu0 0.0
    %106 = vmatprep.subr.mxu0 0.0
    %107 = vmatpush2.xpose.msra.mxu0 0.0
    %108 = vmatprep.subr.mxu0 0.0
    %109 = vmatpush2.xpose.msra.mxu0 0.0
    %110 = vmatprep.subr.mxu0 0.0
    %111 = vmatpush2.xpose.msra.mxu0 0.0
    %112 = vmatprep.subr.mxu0 0.0
    %113 = vmatpush2.xpose.msra.mxu0 0.0
    %114 = vmatprep.subr.mxu0 0.0
    %115 = vmatpush2.xpose.msra.mxu0 0.0
    %116 = vmatprep.mubr.f32.mxu0 0.0
    %117 = vmatmul.mubr.f32.gmra.mxu0 %v20
    %v118 = vpop.f32.mrf.mxu0
    %v119 = vadd.f32 0.0, %v118
    %v120 = vpop.f32.mrf.mxu0
    %121 = vmatprep.mubr.f32.mxu0 0.0
    %122 = vmatmul.mubr.f32.gmra.mxu0 %v21
    %v123 = vpop.f32.mrf.mxu0
    %v124 = vadd.f32 0.0, %v123
    %v125 = vpop.f32.mrf.mxu0
    %126 = vmatprep.mubr.f32.mxu0 0.0
    %127 = vmatmul.mubr.f32.gmra.mxu0 %v22
    %v128 = vpop.f32.mrf.mxu0
    %v129 = vadd.f32 0.0, %v128
    %v130 = vpop.f32.mrf.mxu0
    %131 = vmatprep.mubr.f32.mxu0 0.0
    %132 = vmatmul.mubr.f32.gmra.mxu0 %v23
    %v133 = vpop.f32.mrf.mxu0
    %v134 = vadd.f32 0.0, %v133
    %v135 = vpop.f32.mrf.mxu0
    %136 = vmatprep.mubr.f32.mxu0 0.0
    %137 = vmatmul.mubr.f32.gmra.mxu0 %v24
    %v138 = vpop.f32.mrf.mxu0
    %v139 = vadd.f32 0.0, %v138
    %v140 = vpop.f32.mrf.mxu0
    %141 = vmatprep.mubr.f32.mxu0 0.0
    %142 = vmatmul.mubr.f32.gmra.mxu0 %v25
    %v143 = vpop.f32.mrf.mxu0
    %v144 = vadd.f32 0.0, %v143
    %v145 = vpop.f32.mrf.mxu0
    %146 = vmatprep.mubr.f32.mxu0 0.0
    %147 = vmatmul.mubr.f32.gmra.mxu0 %v26
    %v148 = vpop.f32.mrf.mxu0
    %v149 = vadd.f32 0.0, %v148
    %v150 = vpop.f32.mrf.mxu0
    %151 = vmatprep.mubr.f32.mxu0 0.0
    %152 = vmatmul.mubr.f32.gmra.mxu0 %v27
    %v153 = vpop.f32.mrf.mxu0
    %v154 = vadd.f32 0.0, %v153
    %v155 = vpop.f32.mrf.mxu0
    %156 = vmatprep.mubr.f32.mxu0 0.0
    %157 = vmatmul.mubr.f32.gmra.mxu0 %v28
    %v158 = vpop.f32.mrf.mxu0
    %v159 = vadd.f32 0.0, %v158
    %v160 = vpop.f32.mrf.mxu0
    %161 = vmatprep.mubr.f32.mxu0 0.0
    %162 = vmatmul.mubr.f32.gmra.mxu0 %v29
    %v163 = vpop.f32.mrf.mxu0
    %v164 = vadd.f32 0.0, %v163
    %v165 = vpop.f32.mrf.mxu0
    %166 = vmatprep.mubr.f32.mxu0 0.0
    %167 = vmatmul.mubr.f32.gmra.mxu0 %v30
    %v168 = vpop.f32.mrf.mxu0
    %v169 = vadd.f32 0.0, %v168
    %v170 = vpop.f32.mrf.mxu0
    %171 = vmatprep.mubr.f32.mxu0 0.0
    %172 = vmatmul.mubr.f32.gmra.mxu0 %v31
    %v173 = vpop.f32.mrf.mxu0
    %v174 = vadd.f32 0.0, %v173
    %v175 = vpop.f32.mrf.mxu0
    %176 = vmatprep.mubr.f32.mxu0 0.0
    %177 = vmatmul.mubr.f32.gmra.mxu0 %v32
    %v178 = vpop.f32.mrf.mxu0
    %v179 = vadd.f32 0.0, %v178
    %v180 = vpop.f32.mrf.mxu0
    %181 = vmatprep.mubr.f32.mxu0 0.0
    %182 = vmatmul.mubr.f32.gmra.mxu0 %v33
    %v183 = vpop.f32.mrf.mxu0
    %v184 = vadd.f32 0.0, %v183
    %v185 = vpop.f32.mrf.mxu0
    %186 = vmatprep.mubr.f32.mxu0 0.0
    %187 = vmatmul.mubr.f32.gmra.mxu0 %v34
    %v188 = vpop.f32.mrf.mxu0
    %v189 = vadd.f32 0.0, %v188
    %v190 = vpop.f32.mrf.mxu0
    %191 = vmatprep.mubr.f32.mxu0 0.0
    %192 = vmatmul.mubr.f32.gmra.mxu0 %v35
    %v193 = vpop.f32.mrf.mxu0
    %v194 = vadd.f32 0.0, %v193
    %v195 = vpop.f32.mrf.mxu0
    %196 = vdwg.mxu0
    %v197 = vmul.f32 %v119, 14.285714
    %v198 = vmul.f32 %v124, 14.285714
    %v199 = vmul.f32 %v129, 14.285714
    %v200 = vmul.f32 %v134, 14.285714
    %v201 = vmul.f32 %v139, 14.285714
    %v202 = vmul.f32 %v144, 14.285714
    %v203 = vmul.f32 %v149, 14.285714
    %v204 = vmul.f32 %v154, 14.285714
    %v205 = vmul.f32 %v159, 14.285714
    %v206 = vmul.f32 %v164, 14.285714
    %v207 = vmul.f32 %v169, 14.285714
    %v208 = vmul.f32 %v174, 14.285714
    %v209 = vmul.f32 %v179, 14.285714
    %v210 = vmul.f32 %v184, 14.285714
    %v211 = vmul.f32 %v189, 14.285714
    %v212 = vmul.f32 %v194, 14.285714
    %v213 = vlaneseq
    %v214 = vshrl.u32 %v213, 7
    %v215 = vadd.s32 %v214, 8
    %v216 = vadd.s32 %v214, 16
    %v217 = vadd.s32 %v214, 24
    %v218 = vadd.s32 %v214, 32
    %v219 = vadd.s32 %v214, 40
    %v220 = vadd.s32 %v214, 48
    %v221 = vadd.s32 %v214, 56
    %v222 = vadd.s32 %v214, 64
    %v223 = vadd.s32 %v214, 72
    %v224 = vadd.s32 %v214, 80
    %v225 = vadd.s32 %v214, 88
    %v226 = vadd.s32 %v214, 96
    %v227 = vadd.s32 %v214, 104
    %v228 = vadd.s32 %v214, 112
    %v229 = vadd.s32 %v214, 120
    %v230 = vstv %s18
    %v231 = vadd.s32 %v230, %v214
    %v232 = vadd.s32 %v230, %v215
    %v233 = vadd.s32 %v230, %v216
    %v234 = vadd.s32 %v230, %v217
    %v235 = vadd.s32 %v230, %v218
    %v236 = vadd.s32 %v230, %v219
    %v237 = vadd.s32 %v230, %v220
    %v238 = vadd.s32 %v230, %v221
    %v239 = vadd.s32 %v230, %v222
    %v240 = vadd.s32 %v230, %v223
    %v241 = vadd.s32 %v230, %v224
    %v242 = vadd.s32 %v230, %v225
    %v243 = vadd.s32 %v230, %v226
    %v244 = vadd.s32 %v230, %v227
    %v245 = vadd.s32 %v230, %v228
    %v246 = vadd.s32 %v230, %v229
    %v247 = vlaneseq
    %v248 = vand.u32 %v247, 127
    %vm249 = vcmp.ne.s32.totalorder %v231, %v248
    %vm250 = vcmp.ne.s32.totalorder %v232, %v248
    %vm251 = vcmp.ne.s32.totalorder %v233, %v248
    %vm252 = vcmp.ne.s32.totalorder %v234, %v248
    %vm253 = vcmp.ne.s32.totalorder %v235, %v248
    %vm254 = vcmp.ne.s32.totalorder %v236, %v248
    %vm255 = vcmp.ne.s32.totalorder %v237, %v248
    %vm256 = vcmp.ne.s32.totalorder %v238, %v248
    %vm257 = vcmp.ne.s32.totalorder %v239, %v248
    %vm258 = vcmp.ne.s32.totalorder %v240, %v248
    %vm259 = vcmp.ne.s32.totalorder %v241, %v248
    %vm260 = vcmp.ne.s32.totalorder %v242, %v248
    %vm261 = vcmp.ne.s32.totalorder %v243, %v248
    %vm262 = vcmp.ne.s32.totalorder %v244, %v248
    %vm263 = vcmp.ne.s32.totalorder %v245, %v248
    %vm264 = vcmp.ne.s32.totalorder %v246, %v248
    %v265 = vld [vmem:[%s0] sm:$0xff]
    %v266 = vld [vmem:[%s0 + $0x8] sm:$0xff]
    %v267 = vld [vmem:[%s0 + $0x10] sm:$0xff]
    %v268 = vld [vmem:[%s0 + $0x18] sm:$0xff]
    %v269 = vld [vmem:[%s0 + $0x20] sm:$0xff]
    %v270 = vld [vmem:[%s0 + $0x28] sm:$0xff]
    %v271 = vld [vmem:[%s0 + $0x30] sm:$0xff]
    %v272 = vld [vmem:[%s0 + $0x38] sm:$0xff]
    %v273 = vld [vmem:[%s0 + $0x40] sm:$0xff]
    %v274 = vld [vmem:[%s0 + $0x48] sm:$0xff]
    %v275 = vld [vmem:[%s0 + $0x50] sm:$0xff]
    %v276 = vld [vmem:[%s0 + $0x58] sm:$0xff]
    %v277 = vld [vmem:[%s0 + $0x60] sm:$0xff]
    %v278 = vld [vmem:[%s0 + $0x68] sm:$0xff]
    %v279 = vld [vmem:[%s0 + $0x70] sm:$0xff]
    %v280 = vld [vmem:[%s0 + $0x78] sm:$0xff]
    %v281 = vld [vmem:[%s1] sm:$0x1]
    %282 = vset.pattern.permute.xlu0 0
    %283 = vperm.xlu0 %282, %v265
    %v284 = vpop.permute.xlu0 %283
    %285 = vset.pattern.permute.xlu0 0
    %286 = vperm.xlu0 %285, %v266
    %v287 = vpop.permute.xlu0 %286
    %288 = vset.pattern.permute.xlu0 0
    %289 = vperm.xlu0 %288, %v267
    %v290 = vpop.permute.xlu0 %289
    %291 = vset.pattern.permute.xlu0 0
    %292 = vperm.xlu0 %291, %v268
    %v293 = vpop.permute.xlu0 %292
    %294 = vset.pattern.permute.xlu0 0
    %295 = vperm.xlu0 %294, %v269
    %v296 = vpop.permute.xlu0 %295
    %297 = vset.pattern.permute.xlu0 0
    %298 = vperm.xlu0 %297, %v270
    %v299 = vpop.permute.xlu0 %298
    %300 = vset.pattern.permute.xlu0 0
    %301 = vperm.xlu0 %300, %v271
    %v302 = vpop.permute.xlu0 %301
    %303 = vset.pattern.permute.xlu0 0
    %304 = vperm.xlu0 %303, %v272
    %v305 = vpop.permute.xlu0 %304
    %306 = vset.pattern.permute.xlu0 0
    %307 = vperm.xlu0 %306, %v273
    %v308 = vpop.permute.xlu0 %307
    %309 = vset.pattern.permute.xlu0 0
    %310 = vperm.xlu0 %309, %v274
    %v311 = vpop.permute.xlu0 %310
    %312 = vset.pattern.permute.xlu0 0
    %313 = vperm.xlu0 %312, %v275
    %v314 = vpop.permute.xlu0 %313
    %315 = vset.pattern.permute.xlu0 0
    %316 = vperm.xlu0 %315, %v276
    %v317 = vpop.permute.xlu0 %316
    %318 = vset.pattern.permute.xlu0 0
    %319 = vperm.xlu0 %318, %v277
    %v320 = vpop.permute.xlu0 %319
    %321 = vset.pattern.permute.xlu0 0
    %322 = vperm.xlu0 %321, %v278
    %v323 = vpop.permute.xlu0 %322
    %324 = vset.pattern.permute.xlu0 0
    %325 = vperm.xlu0 %324, %v279
    %v326 = vpop.permute.xlu0 %325
    %327 = vset.pattern.permute.xlu0 0
    %328 = vperm.xlu0 %327, %v280
    %v329 = vpop.permute.xlu0 %328
    %v330 = vlaneseq
    %v331 = vshrl.u32 %v330, 7
    %v332 = vsub.s32 0, %v331
    %v333 = vrot.slane %v281, %v332
    %vm334 = vcmp.eq.s32.totalorder %v284, %v333
    %vm335 = vcmp.eq.s32.totalorder %v287, %v333
    %vm336 = vcmp.eq.s32.totalorder %v290, %v333
    %vm337 = vcmp.eq.s32.totalorder %v293, %v333
    %vm338 = vcmp.eq.s32.totalorder %v296, %v333
    %vm339 = vcmp.eq.s32.totalorder %v299, %v333
    %vm340 = vcmp.eq.s32.totalorder %v302, %v333
    %vm341 = vcmp.eq.s32.totalorder %v305, %v333
    %vm342 = vcmp.eq.s32.totalorder %v308, %v333
    %vm343 = vcmp.eq.s32.totalorder %v311, %v333
    %vm344 = vcmp.eq.s32.totalorder %v314, %v333
    %vm345 = vcmp.eq.s32.totalorder %v317, %v333
    %vm346 = vcmp.eq.s32.totalorder %v320, %v333
    %vm347 = vcmp.eq.s32.totalorder %v323, %v333
    %vm348 = vcmp.eq.s32.totalorder %v326, %v333
    %vm349 = vcmp.eq.s32.totalorder %v329, %v333
    %vm350 = vcmp.lt.s32.totalorder %v248, 8
    %vm351 = vmand %vm249, %vm350
    %vm352 = vmand %vm250, %vm350
    %vm353 = vmand %vm251, %vm350
    %vm354 = vmand %vm252, %vm350
    %vm355 = vmand %vm253, %vm350
    %vm356 = vmand %vm254, %vm350
    %vm357 = vmand %vm255, %vm350
    %vm358 = vmand %vm256, %vm350
    %vm359 = vmand %vm257, %vm350
    %vm360 = vmand %vm258, %vm350
    %vm361 = vmand %vm259, %vm350
    %vm362 = vmand %vm260, %vm350
    %vm363 = vmand %vm261, %vm350
    %vm364 = vmand %vm262, %vm350
    %vm365 = vmand %vm263, %vm350
    %vm366 = vmand %vm264, %vm350
    %vm367 = vmand %vm334, %vm351
    %vm368 = vmand %vm335, %vm352
    %vm369 = vmand %vm336, %vm353
    %vm370 = vmand %vm337, %vm354
    %vm371 = vmand %vm338, %vm355
    %vm372 = vmand %vm339, %vm356
    %vm373 = vmand %vm340, %vm357
    %vm374 = vmand %vm341, %vm358
    %vm375 = vmand %vm342, %vm359
    %vm376 = vmand %vm343, %vm360
    %vm377 = vmand %vm344, %vm361
    %vm378 = vmand %vm345, %vm362
    %vm379 = vmand %vm346, %vm363
    %vm380 = vmand %vm347, %vm364
    %vm381 = vmand %vm348, %vm365
    %vm382 = vmand %vm349, %vm366
    %383 = vmax.xlane.f32.xlu0 %v197
    %v384 = vpop.xlane.xlu0 %383
    %385 = vmax.xlane.f32.xlu0 %v198
    %v386 = vpop.xlane.xlu0 %385
    %387 = vmax.xlane.f32.xlu0 %v199
    %v388 = vpop.xlane.xlu0 %387
    %389 = vmax.xlane.f32.xlu0 %v200
    %v390 = vpop.xlane.xlu0 %389
    %391 = vmax.xlane.f32.xlu0 %v201
    %v392 = vpop.xlane.xlu0 %391
    %393 = vmax.xlane.f32.xlu0 %v202
    %v394 = vpop.xlane.xlu0 %393
    %395 = vmax.xlane.f32.xlu0 %v203
    %v396 = vpop.xlane.xlu0 %395
    %397 = vmax.xlane.f32.xlu0 %v204
    %v398 = vpop.xlane.xlu0 %397
    %399 = vmax.xlane.f32.xlu0 %v205
    %v400 = vpop.xlane.xlu0 %399
    %401 = vmax.xlane.f32.xlu0 %v206
    %v402 = vpop.xlane.xlu0 %401
    %403 = vmax.xlane.f32.xlu0 %v207
    %v404 = vpop.xlane.xlu0 %403
    %405 = vmax.xlane.f32.xlu0 %v208
    %v406 = vpop.xlane.xlu0 %405
    %407 = vmax.xlane.f32.xlu0 %v209
    %v408 = vpop.xlane.xlu0 %407
    %409 = vmax.xlane.f32.xlu0 %v210
    %v410 = vpop.xlane.xlu0 %409
    %411 = vmax.xlane.f32.xlu0 %v211
    %v412 = vpop.xlane.xlu0 %411
    %413 = vmax.xlane.f32.xlu0 %v212
    %v414 = vpop.xlane.xlu0 %413
    %v415 = vsub.f32 %v197, %v384
    %v416 = vsub.f32 %v198, %v386
    %v417 = vsub.f32 %v199, %v388
    %v418 = vsub.f32 %v200, %v390
    %v419 = vsub.f32 %v201, %v392
    %v420 = vsub.f32 %v202, %v394
    %v421 = vsub.f32 %v203, %v396
    %v422 = vsub.f32 %v204, %v398
    %v423 = vsub.f32 %v205, %v400
    %v424 = vsub.f32 %v206, %v402
    %v425 = vsub.f32 %v207, %v404
    %v426 = vsub.f32 %v208, %v406
    %v427 = vsub.f32 %v209, %v408
    %v428 = vsub.f32 %v210, %v410
    %v429 = vsub.f32 %v211, %v412
    %v430 = vsub.f32 %v212, %v414
    %v431 = vmul.f32 %v415, 1.442695
    %v432 = vpow.pop %v431
    %v433 = vmul.f32 %v416, 1.442695
    %v434 = vpow.pop %v433
    %v435 = vmul.f32 %v417, 1.442695
    %v436 = vpow.pop %v435
    %v437 = vmul.f32 %v418, 1.442695
    %v438 = vpow.pop %v437
    %v439 = vmul.f32 %v419, 1.442695
    %v440 = vpow.pop %v439
    %v441 = vmul.f32 %v420, 1.442695
    %v442 = vpow.pop %v441
    %v443 = vmul.f32 %v421, 1.442695
    %v444 = vpow.pop %v443
    %v445 = vmul.f32 %v422, 1.442695
    %v446 = vpow.pop %v445
    %v447 = vmul.f32 %v423, 1.442695
    %v448 = vpow.pop %v447
    %v449 = vmul.f32 %v424, 1.442695
    %v450 = vpow.pop %v449
    %v451 = vmul.f32 %v425, 1.442695
    %v452 = vpow.pop %v451
    %v453 = vmul.f32 %v426, 1.442695
    %v454 = vpow.pop %v453
    %v455 = vmul.f32 %v427, 1.442695
    %v456 = vpow.pop %v455
    %v457 = vmul.f32 %v428, 1.442695
    %v458 = vpow.pop %v457
    %v459 = vmul.f32 %v429, 1.442695
    %v460 = vpow.pop %v459
    %v461 = vmul.f32 %v430, 1.442695
    %v462 = vpow.pop %v461
    %v463 = vsel %vm351, %v432, 0.0
    %v464 = vsel %vm352, %v434, 0.0
    %v465 = vsel %vm353, %v436, 0.0
    %v466 = vsel %vm354, %v438, 0.0
    %v467 = vsel %vm355, %v440, 0.0
    %v468 = vsel %vm356, %v442, 0.0
    %v469 = vsel %vm357, %v444, 0.0
    %v470 = vsel %vm358, %v446, 0.0
    %v471 = vsel %vm359, %v448, 0.0
    %v472 = vsel %vm360, %v450, 0.0
    %v473 = vsel %vm361, %v452, 0.0
    %v474 = vsel %vm362, %v454, 0.0
    %v475 = vsel %vm363, %v456, 0.0
    %v476 = vsel %vm364, %v458, 0.0
    %v477 = vsel %vm365, %v460, 0.0
    %v478 = vsel %vm366, %v462, 0.0
    %479 = vadd.xlane.f32.xlu0 %v463
    %v480 = vpop.xlane.xlu0 %479
    %481 = vadd.xlane.f32.xlu0 %v464
    %v482 = vpop.xlane.xlu0 %481
    %483 = vadd.xlane.f32.xlu0 %v465
    %v484 = vpop.xlane.xlu0 %483
    %485 = vadd.xlane.f32.xlu0 %v466
    %v486 = vpop.xlane.xlu0 %485
    %487 = vadd.xlane.f32.xlu0 %v467
    %v488 = vpop.xlane.xlu0 %487
    %489 = vadd.xlane.f32.xlu0 %v468
    %v490 = vpop.xlane.xlu0 %489
    %491 = vadd.xlane.f32.xlu0 %v469
    %v492 = vpop.xlane.xlu0 %491
    %493 = vadd.xlane.f32.xlu0 %v470
    %v494 = vpop.xlane.xlu0 %493
    %495 = vadd.xlane.f32.xlu0 %v471
    %v496 = vpop.xlane.xlu0 %495
    %497 = vadd.xlane.f32.xlu0 %v472
    %v498 = vpop.xlane.xlu0 %497
    %499 = vadd.xlane.f32.xlu0 %v473
    %v500 = vpop.xlane.xlu0 %499
    %501 = vadd.xlane.f32.xlu0 %v474
    %v502 = vpop.xlane.xlu0 %501
    %503 = vadd.xlane.f32.xlu0 %v475
    %v504 = vpop.xlane.xlu0 %503
    %505 = vadd.xlane.f32.xlu0 %v476
    %v506 = vpop.xlane.xlu0 %505
    %507 = vadd.xlane.f32.xlu0 %v477
    %v508 = vpop.xlane.xlu0 %507
    %509 = vadd.xlane.f32.xlu0 %v478
    %v510 = vpop.xlane.xlu0 %509
    %v511 = vmax.f32 %v480, 1e-30
    %v512 = vmax.f32 %v482, 1e-30
    %v513 = vmax.f32 %v484, 1e-30
    %v514 = vmax.f32 %v486, 1e-30
    %v515 = vmax.f32 %v488, 1e-30
    %v516 = vmax.f32 %v490, 1e-30
    %v517 = vmax.f32 %v492, 1e-30
    %v518 = vmax.f32 %v494, 1e-30
    %v519 = vmax.f32 %v496, 1e-30
    %v520 = vmax.f32 %v498, 1e-30
    %v521 = vmax.f32 %v500, 1e-30
    %v522 = vmax.f32 %v502, 1e-30
    %v523 = vmax.f32 %v504, 1e-30
    %v524 = vmax.f32 %v506, 1e-30
    %v525 = vmax.f32 %v508, 1e-30
    %v526 = vmax.f32 %v510, 1e-30
    %v527 = vsel %vm367, 1.0, 0.0
    %v528 = vsel %vm368, 1.0, 0.0
    %v529 = vsel %vm369, 1.0, 0.0
    %v530 = vsel %vm370, 1.0, 0.0
    %v531 = vsel %vm371, 1.0, 0.0
    %v532 = vsel %vm372, 1.0, 0.0
    %v533 = vsel %vm373, 1.0, 0.0
    %v534 = vsel %vm374, 1.0, 0.0
    %v535 = vsel %vm375, 1.0, 0.0
    %v536 = vsel %vm376, 1.0, 0.0
    %v537 = vsel %vm377, 1.0, 0.0
    %v538 = vsel %vm378, 1.0, 0.0
    %v539 = vsel %vm379, 1.0, 0.0
    %v540 = vsel %vm380, 1.0, 0.0
    %v541 = vsel %vm381, 1.0, 0.0
    %v542 = vsel %vm382, 1.0, 0.0
    %543 = vadd.xlane.f32.xlu0 %v527
    %v544 = vpop.xlane.xlu0 %543
    %545 = vadd.xlane.f32.xlu0 %v528
    %v546 = vpop.xlane.xlu0 %545
    %547 = vadd.xlane.f32.xlu0 %v529
    %v548 = vpop.xlane.xlu0 %547
    %549 = vadd.xlane.f32.xlu0 %v530
    %v550 = vpop.xlane.xlu0 %549
    %551 = vadd.xlane.f32.xlu0 %v531
    %v552 = vpop.xlane.xlu0 %551
    %553 = vadd.xlane.f32.xlu0 %v532
    %v554 = vpop.xlane.xlu0 %553
    %555 = vadd.xlane.f32.xlu0 %v533
    %v556 = vpop.xlane.xlu0 %555
    %557 = vadd.xlane.f32.xlu0 %v534
    %v558 = vpop.xlane.xlu0 %557
    %559 = vadd.xlane.f32.xlu0 %v535
    %v560 = vpop.xlane.xlu0 %559
    %561 = vadd.xlane.f32.xlu0 %v536
    %v562 = vpop.xlane.xlu0 %561
    %563 = vadd.xlane.f32.xlu0 %v537
    %v564 = vpop.xlane.xlu0 %563
    %565 = vadd.xlane.f32.xlu0 %v538
    %v566 = vpop.xlane.xlu0 %565
    %567 = vadd.xlane.f32.xlu0 %v539
    %v568 = vpop.xlane.xlu0 %567
    %569 = vadd.xlane.f32.xlu0 %v540
    %v570 = vpop.xlane.xlu0 %569
    %571 = vadd.xlane.f32.xlu0 %v541
    %v572 = vpop.xlane.xlu0 %571
    %573 = vadd.xlane.f32.xlu0 %v542
    %v574 = vpop.xlane.xlu0 %573
    %v575 = vsel %vm367, %v415, 0.0
    %v576 = vsel %vm368, %v416, 0.0
    %v577 = vsel %vm369, %v417, 0.0
    %v578 = vsel %vm370, %v418, 0.0
    %v579 = vsel %vm371, %v419, 0.0
    %v580 = vsel %vm372, %v420, 0.0
    %v581 = vsel %vm373, %v421, 0.0
    %v582 = vsel %vm374, %v422, 0.0
    %v583 = vsel %vm375, %v423, 0.0
    %v584 = vsel %vm376, %v424, 0.0
    %v585 = vsel %vm377, %v425, 0.0
    %v586 = vsel %vm378, %v426, 0.0
    %v587 = vsel %vm379, %v427, 0.0
    %v588 = vsel %vm380, %v428, 0.0
    %v589 = vsel %vm381, %v429, 0.0
    %v590 = vsel %vm382, %v430, 0.0
    %591 = vadd.xlane.f32.xlu0 %v575
    %v592 = vpop.xlane.xlu0 %591
    %593 = vadd.xlane.f32.xlu0 %v576
    %v594 = vpop.xlane.xlu0 %593
    %595 = vadd.xlane.f32.xlu0 %v577
    %v596 = vpop.xlane.xlu0 %595
    %597 = vadd.xlane.f32.xlu0 %v578
    %v598 = vpop.xlane.xlu0 %597
    %599 = vadd.xlane.f32.xlu0 %v579
    %v600 = vpop.xlane.xlu0 %599
    %601 = vadd.xlane.f32.xlu0 %v580
    %v602 = vpop.xlane.xlu0 %601
    %603 = vadd.xlane.f32.xlu0 %v581
    %v604 = vpop.xlane.xlu0 %603
    %605 = vadd.xlane.f32.xlu0 %v582
    %v606 = vpop.xlane.xlu0 %605
    %607 = vadd.xlane.f32.xlu0 %v583
    %v608 = vpop.xlane.xlu0 %607
    %609 = vadd.xlane.f32.xlu0 %v584
    %v610 = vpop.xlane.xlu0 %609
    %611 = vadd.xlane.f32.xlu0 %v585
    %v612 = vpop.xlane.xlu0 %611
    %613 = vadd.xlane.f32.xlu0 %v586
    %v614 = vpop.xlane.xlu0 %613
    %615 = vadd.xlane.f32.xlu0 %v587
    %v616 = vpop.xlane.xlu0 %615
    %617 = vadd.xlane.f32.xlu0 %v588
    %v618 = vpop.xlane.xlu0 %617
    %619 = vadd.xlane.f32.xlu0 %v589
    %v620 = vpop.xlane.xlu0 %619
    %621 = vadd.xlane.f32.xlu0 %v590
    %v622 = vpop.xlane.xlu0 %621
    %v623 = vlog2.pop %v511
    %v624 = vmul.f32 %v623, 0.6931472
    %v625 = vlog2.pop %v512
    %v626 = vmul.f32 %v625, 0.6931472
    %v627 = vlog2.pop %v513
    %v628 = vmul.f32 %v627, 0.6931472
    %v629 = vlog2.pop %v514
    %v630 = vmul.f32 %v629, 0.6931472
    %v631 = vlog2.pop %v515
    %v632 = vmul.f32 %v631, 0.6931472
    %v633 = vlog2.pop %v516
    %v634 = vmul.f32 %v633, 0.6931472
    %v635 = vlog2.pop %v517
    %v636 = vmul.f32 %v635, 0.6931472
    %v637 = vlog2.pop %v518
    %v638 = vmul.f32 %v637, 0.6931472
    %v639 = vlog2.pop %v519
    %v640 = vmul.f32 %v639, 0.6931472
    %v641 = vlog2.pop %v520
    %v642 = vmul.f32 %v641, 0.6931472
    %v643 = vlog2.pop %v521
    %v644 = vmul.f32 %v643, 0.6931472
    %v645 = vlog2.pop %v522
    %v646 = vmul.f32 %v645, 0.6931472
    %v647 = vlog2.pop %v523
    %v648 = vmul.f32 %v647, 0.6931472
    %v649 = vlog2.pop %v524
    %v650 = vmul.f32 %v649, 0.6931472
    %v651 = vlog2.pop %v525
    %v652 = vmul.f32 %v651, 0.6931472
    %v653 = vlog2.pop %v526
    %v654 = vmul.f32 %v653, 0.6931472
    %v655 = vmul.f32 %v544, %v624
    %v656 = vmul.f32 %v546, %v626
    %v657 = vmul.f32 %v548, %v628
    %v658 = vmul.f32 %v550, %v630
    %v659 = vmul.f32 %v552, %v632
    %v660 = vmul.f32 %v554, %v634
    %v661 = vmul.f32 %v556, %v636
    %v662 = vmul.f32 %v558, %v638
    %v663 = vmul.f32 %v560, %v640
    %v664 = vmul.f32 %v562, %v642
    %v665 = vmul.f32 %v564, %v644
    %v666 = vmul.f32 %v566, %v646
    %v667 = vmul.f32 %v568, %v648
    %v668 = vmul.f32 %v570, %v650
    %v669 = vmul.f32 %v572, %v652
    %v670 = vmul.f32 %v574, %v654
    %v671 = vsub.f32 %v592, %v655
    %v672 = vsub.f32 %v594, %v656
    %v673 = vsub.f32 %v596, %v657
    %v674 = vsub.f32 %v598, %v658
    %v675 = vsub.f32 %v600, %v659
    %v676 = vsub.f32 %v602, %v660
    %v677 = vsub.f32 %v604, %v661
    %v678 = vsub.f32 %v606, %v662
    %v679 = vsub.f32 %v608, %v663
    %v680 = vsub.f32 %v610, %v664
    %v681 = vsub.f32 %v612, %v665
    %v682 = vsub.f32 %v614, %v666
    %v683 = vsub.f32 %v616, %v667
    %v684 = vsub.f32 %v618, %v668
    %v685 = vsub.f32 %v620, %v669
    %v686 = vsub.f32 %v622, %v670
    %v687 = vmax.f32 %v544, 1.0
    %v688 = vmax.f32 %v546, 1.0
    %v689 = vmax.f32 %v548, 1.0
    %v690 = vmax.f32 %v550, 1.0
    %v691 = vmax.f32 %v552, 1.0
    %v692 = vmax.f32 %v554, 1.0
    %v693 = vmax.f32 %v556, 1.0
    %v694 = vmax.f32 %v558, 1.0
    %v695 = vmax.f32 %v560, 1.0
    %v696 = vmax.f32 %v562, 1.0
    %v697 = vmax.f32 %v564, 1.0
    %v698 = vmax.f32 %v566, 1.0
    %v699 = vmax.f32 %v568, 1.0
    %v700 = vmax.f32 %v570, 1.0
    %v701 = vmax.f32 %v572, 1.0
    %v702 = vmax.f32 %v574, 1.0
    %v703 = vrcp.pop %v687
    %v704 = vmul.f32 %v671, %v703
    %v705 = vrcp.pop %v688
    %v706 = vmul.f32 %v672, %v705
    %v707 = vrcp.pop %v689
    %v708 = vmul.f32 %v673, %v707
    %v709 = vrcp.pop %v690
    %v710 = vmul.f32 %v674, %v709
    %v711 = vrcp.pop %v691
    %v712 = vmul.f32 %v675, %v711
    %v713 = vrcp.pop %v692
    %v714 = vmul.f32 %v676, %v713
    %v715 = vrcp.pop %v693
    %v716 = vmul.f32 %v677, %v715
    %v717 = vrcp.pop %v694
    %v718 = vmul.f32 %v678, %v717
    %v719 = vrcp.pop %v695
    %v720 = vmul.f32 %v679, %v719
    %v721 = vrcp.pop %v696
    %v722 = vmul.f32 %v680, %v721
    %v723 = vrcp.pop %v697
    %v724 = vmul.f32 %v681, %v723
    %v725 = vrcp.pop %v698
    %v726 = vmul.f32 %v682, %v725
    %v727 = vrcp.pop %v699
    %v728 = vmul.f32 %v683, %v727
    %v729 = vrcp.pop %v700
    %v730 = vmul.f32 %v684, %v729
    %v731 = vrcp.pop %v701
    %v732 = vmul.f32 %v685, %v731
    %v733 = vrcp.pop %v702
    %v734 = vmul.f32 %v686, %v733
    %v735 = vsub.f32 0.0, %v704
    %v736 = vsub.f32 0.0, %v706
    %v737 = vsub.f32 0.0, %v708
    %v738 = vsub.f32 0.0, %v710
    %v739 = vsub.f32 0.0, %v712
    %v740 = vsub.f32 0.0, %v714
    %v741 = vsub.f32 0.0, %v716
    %v742 = vsub.f32 0.0, %v718
    %v743 = vsub.f32 0.0, %v720
    %v744 = vsub.f32 0.0, %v722
    %v745 = vsub.f32 0.0, %v724
    %v746 = vsub.f32 0.0, %v726
    %v747 = vsub.f32 0.0, %v728
    %v748 = vsub.f32 0.0, %v730
    %v749 = vsub.f32 0.0, %v732
    %v750 = vsub.f32 0.0, %v734
    %v751 = vmul.f32 %v735, 0.07
    %v752 = vmul.f32 %v736, 0.07
    %v753 = vmul.f32 %v737, 0.07
    %v754 = vmul.f32 %v738, 0.07
    %v755 = vmul.f32 %v739, 0.07
    %v756 = vmul.f32 %v740, 0.07
    %v757 = vmul.f32 %v741, 0.07
    %v758 = vmul.f32 %v742, 0.07
    %v759 = vmul.f32 %v743, 0.07
    %v760 = vmul.f32 %v744, 0.07
    %v761 = vmul.f32 %v745, 0.07
    %v762 = vmul.f32 %v746, 0.07
    %v763 = vmul.f32 %v747, 0.07
    %v764 = vmul.f32 %v748, 0.07
    %v765 = vmul.f32 %v749, 0.07
    %v766 = vmul.f32 %v750, 0.07
    %v783 = vlaneseq
    %v784 = vshrl.u32 %v783, 7
    %v785 = vsub.s32 %v248, %v784
    %v786 = vrot.slane %v751, %v785
    %v787 = vadd.s32 %v248, 4294967288
    %v788 = vlaneseq
    %v789 = vshrl.u32 %v788, 7
    %v790 = vsub.s32 %v787, %v789
    %v791 = vrot.slane %v752, %v790
    %vm792 = vcmask 130112
    %v793 = vsel %vm792, %v791, %v786
    %v794 = vadd.s32 %v248, 4294967280
    %v795 = vlaneseq
    %v796 = vshrl.u32 %v795, 7
    %v797 = vsub.s32 %v794, %v796
    %v798 = vrot.slane %v753, %v797
    %vm799 = vcmask 195712
    %v800 = vsel %vm799, %v798, %v793
    %v801 = vadd.s32 %v248, 4294967272
    %v802 = vlaneseq
    %v803 = vshrl.u32 %v802, 7
    %v804 = vsub.s32 %v801, %v803
    %v805 = vrot.slane %v754, %v804
    %vm806 = vcmask 261312
    %v807 = vsel %vm806, %v805, %v800
    %v808 = vadd.s32 %v248, 4294967264
    %v809 = vlaneseq
    %v810 = vshrl.u32 %v809, 7
    %v811 = vsub.s32 %v808, %v810
    %v812 = vrot.slane %v755, %v811
    %vm813 = vcmask 326912
    %v814 = vsel %vm813, %v812, %v807
    %v815 = vadd.s32 %v248, 4294967256
    %v816 = vlaneseq
    %v817 = vshrl.u32 %v816, 7
    %v818 = vsub.s32 %v815, %v817
    %v819 = vrot.slane %v756, %v818
    %vm820 = vcmask 392512
    %v821 = vsel %vm820, %v819, %v814
    %v822 = vadd.s32 %v248, 4294967248
    %v823 = vlaneseq
    %v824 = vshrl.u32 %v823, 7
    %v825 = vsub.s32 %v822, %v824
    %v826 = vrot.slane %v757, %v825
    %vm827 = vcmask 458112
    %v828 = vsel %vm827, %v826, %v821
    %v829 = vadd.s32 %v248, 4294967240
    %v830 = vlaneseq
    %v831 = vshrl.u32 %v830, 7
    %v832 = vsub.s32 %v829, %v831
    %v833 = vrot.slane %v758, %v832
    %vm834 = vcmask 523712
    %v835 = vsel %vm834, %v833, %v828
    %v836 = vadd.s32 %v248, 4294967232
    %v837 = vlaneseq
    %v838 = vshrl.u32 %v837, 7
    %v839 = vsub.s32 %v836, %v838
    %v840 = vrot.slane %v759, %v839
    %vm841 = vcmask 589312
    %v842 = vsel %vm841, %v840, %v835
    %v843 = vadd.s32 %v248, 4294967224
    %v844 = vlaneseq
    %v845 = vshrl.u32 %v844, 7
    %v846 = vsub.s32 %v843, %v845
    %v847 = vrot.slane %v760, %v846
    %vm848 = vcmask 654912
    %v849 = vsel %vm848, %v847, %v842
    %v850 = vadd.s32 %v248, 4294967216
    %v851 = vlaneseq
    %v852 = vshrl.u32 %v851, 7
    %v853 = vsub.s32 %v850, %v852
    %v854 = vrot.slane %v761, %v853
    %vm855 = vcmask 720512
    %v856 = vsel %vm855, %v854, %v849
    %v857 = vadd.s32 %v248, 4294967208
    %v858 = vlaneseq
    %v859 = vshrl.u32 %v858, 7
    %v860 = vsub.s32 %v857, %v859
    %v861 = vrot.slane %v762, %v860
    %vm862 = vcmask 786112
    %v863 = vsel %vm862, %v861, %v856
    %v864 = vadd.s32 %v248, 4294967200
    %v865 = vlaneseq
    %v866 = vshrl.u32 %v865, 7
    %v867 = vsub.s32 %v864, %v866
    %v868 = vrot.slane %v763, %v867
    %vm869 = vcmask 851712
    %v870 = vsel %vm869, %v868, %v863
    %v871 = vadd.s32 %v248, 4294967192
    %v872 = vlaneseq
    %v873 = vshrl.u32 %v872, 7
    %v874 = vsub.s32 %v871, %v873
    %v875 = vrot.slane %v764, %v874
    %vm876 = vcmask 917312
    %v877 = vsel %vm876, %v875, %v870
    %v878 = vadd.s32 %v248, 4294967184
    %v879 = vlaneseq
    %v880 = vshrl.u32 %v879, 7
    %v881 = vsub.s32 %v878, %v880
    %v882 = vrot.slane %v765, %v881
    %vm883 = vcmask 982912
    %v884 = vsel %vm883, %v882, %v877
    %v885 = vadd.s32 %v248, 4294967176
    %v886 = vlaneseq
    %v887 = vshrl.u32 %v886, 7
    %v888 = vsub.s32 %v885, %v887
    %v889 = vrot.slane %v766, %v888
    %vm890 = vcmask 1048512
    %v891 = vsel %vm890, %v889, %v884
    %893 = vst [vmem:[#allocation2] sm:$0x1] %v891
    %v910 = vlaneseq
    %v911 = vshrl.u32 %v910, 7
    %v912 = vsub.s32 %v248, %v911
    %v913 = vrot.slane %v544, %v912
    %v914 = vlaneseq
    %v915 = vshrl.u32 %v914, 7
    %v916 = vsub.s32 %v787, %v915
    %v917 = vrot.slane %v546, %v916
    %v918 = vsel %vm792, %v917, %v913
    %v919 = vlaneseq
    %v920 = vshrl.u32 %v919, 7
    %v921 = vsub.s32 %v794, %v920
    %v922 = vrot.slane %v548, %v921
    %v923 = vsel %vm799, %v922, %v918
    %v924 = vlaneseq
    %v925 = vshrl.u32 %v924, 7
    %v926 = vsub.s32 %v801, %v925
    %v927 = vrot.slane %v550, %v926
    %v928 = vsel %vm806, %v927, %v923
    %v929 = vlaneseq
    %v930 = vshrl.u32 %v929, 7
    %v931 = vsub.s32 %v808, %v930
    %v932 = vrot.slane %v552, %v931
    %v933 = vsel %vm813, %v932, %v928
    %v934 = vlaneseq
    %v935 = vshrl.u32 %v934, 7
    %v936 = vsub.s32 %v815, %v935
    %v937 = vrot.slane %v554, %v936
    %v938 = vsel %vm820, %v937, %v933
    %v939 = vlaneseq
    %v940 = vshrl.u32 %v939, 7
    %v941 = vsub.s32 %v822, %v940
    %v942 = vrot.slane %v556, %v941
    %v943 = vsel %vm827, %v942, %v938
    %v944 = vlaneseq
    %v945 = vshrl.u32 %v944, 7
    %v946 = vsub.s32 %v829, %v945
    %v947 = vrot.slane %v558, %v946
    %v948 = vsel %vm834, %v947, %v943
    %v949 = vlaneseq
    %v950 = vshrl.u32 %v949, 7
    %v951 = vsub.s32 %v836, %v950
    %v952 = vrot.slane %v560, %v951
    %v953 = vsel %vm841, %v952, %v948
    %v954 = vlaneseq
    %v955 = vshrl.u32 %v954, 7
    %v956 = vsub.s32 %v843, %v955
    %v957 = vrot.slane %v562, %v956
    %v958 = vsel %vm848, %v957, %v953
    %v959 = vlaneseq
    %v960 = vshrl.u32 %v959, 7
    %v961 = vsub.s32 %v850, %v960
    %v962 = vrot.slane %v564, %v961
    %v963 = vsel %vm855, %v962, %v958
    %v964 = vlaneseq
    %v965 = vshrl.u32 %v964, 7
    %v966 = vsub.s32 %v857, %v965
    %v967 = vrot.slane %v566, %v966
    %v968 = vsel %vm862, %v967, %v963
    %v969 = vlaneseq
    %v970 = vshrl.u32 %v969, 7
    %v971 = vsub.s32 %v864, %v970
    %v972 = vrot.slane %v568, %v971
    %v973 = vsel %vm869, %v972, %v968
    %v974 = vlaneseq
    %v975 = vshrl.u32 %v974, 7
    %v976 = vsub.s32 %v871, %v975
    %v977 = vrot.slane %v570, %v976
    %v978 = vsel %vm876, %v977, %v973
    %v979 = vlaneseq
    %v980 = vshrl.u32 %v979, 7
    %v981 = vsub.s32 %v878, %v980
    %v982 = vrot.slane %v572, %v981
    %v983 = vsel %vm883, %v982, %v978
    %v984 = vlaneseq
    %v985 = vshrl.u32 %v984, 7
    %v986 = vsub.s32 %v885, %v985
    %v987 = vrot.slane %v574, %v986
    %v988 = vsel %vm890, %v987, %v983
    %990 = vst [vmem:[#allocation4] sm:$0x1] %v988
    // Predicated region
    $region14: #{tpu_custom_call.1} parent=1 // pred_check
      _
    $region15: #{tpu_custom_call.1} parent=1 // pred_check_branch
      %992 = sbr.rel (0) target = $region17
    $region16: #{tpu_custom_call.1} parent=1 // pred_region
      %s994 = ssub.s32 16, 16
      %995 = vsyncadd [#allocation3], %s994
      %s997 = sshll.u32 [#allocation2], 4
      %s998 = int_to_ptr.vmem [resolvable:$true] %s997
      %1000 = dma.vmem_to_hbm [thread:$0]  %s998, 16, %s3, [#allocation3]
    $region17: #{tpu_custom_call.1} parent=1 // pred_fallthru
      _
    // Predicated region
    $region18: #{tpu_custom_call.1} parent=1 // pred_check
      _
    $region19: #{tpu_custom_call.1} parent=1 // pred_check_branch
      %1002 = sbr.rel (0) target = $region21
    $region20: #{tpu_custom_call.1} parent=1 // pred_region
      %s1004 = ssub.s32 16, 16
      %1005 = vsyncadd [#allocation5], %s1004
      %s1007 = sshll.u32 [#allocation4], 4
      %s1008 = int_to_ptr.vmem [resolvable:$true] %s1007
      %1010 = dma.vmem_to_hbm [thread:$0]  %s1008, 16, %s4, [#allocation5]
    $region21: #{tpu_custom_call.1} parent=1 // pred_fallthru
      _
    // Predicated region
    $region22: #{tpu_custom_call.1} parent=1 // pred_check
      _
    $region23: #{tpu_custom_call.1} parent=1 // pred_check_branch
      %1012 = sbr.rel (0) target = $region25
    $region24: #{tpu_custom_call.1} parent=1 // pred_region
      %1013 = dma.done [#allocation3], 16
    $region25: #{tpu_custom_call.1} parent=1 // pred_fallthru
      _
    // Predicated region
    $region26: #{tpu_custom_call.1} parent=1 // pred_check
      _
    $region27: #{tpu_custom_call.1} parent=1 // pred_check_branch
      %1015 = sbr.rel (0) target = $region29
    $region28: #{tpu_custom_call.1} parent=1 // pred_region
      %1016 = dma.done [#allocation5], 16
    $region29: #{tpu_custom_call.1} parent=1 // pred_fallthru
      _
    %1017 = vsyncpa [#allocation3], 1
    %1018 = vsyncpa [#allocation5], 1

</llo_original>
